<compile_context>
chip_gen: v6e
topology: v6e:2x2x1
jax: 0.10.0
libtpu: 0.0.40
codegen_flags: <defaults>
</compile_context>

<pallas_src>
import functools

import jax
import jax.numpy as jnp
from jax.experimental import pallas as pl
from jax.experimental.pallas import tpu as pltpu


# ---------------------------------------------------------------------------
# VMEM budget: ~3/4 of physical VMEM, capped at 96 MiB.
#   v5e/v6e (128 MiB physical) -> 96 MiB, v7x (64 MiB) -> 48 MiB.
# ---------------------------------------------------------------------------
@functools.lru_cache(maxsize=None)
def _vmem_limit_bytes():
    try:
        cap = int(pltpu.get_tpu_info().vmem_capacity_bytes)
    except Exception:
        cap = 64 * 1024 * 1024
    return int(min(cap * 3 // 4, 96 * 1024 * 1024))


def _pick_batch_tile(dim, target, align=16, prefer_split=True):
    """Batch tile + padded dim.

    Returns (tile, padded_dim); tile == dim (full extent) or a multiple of
    `align` (bf16 sublane packing) that divides padded_dim.  `prefer_split`
    caps the tile so the batch grid has >= 2 steps when dim allows, keeping
    both v7x TensorCores busy under the "parallel" batch axis.
    """
    if prefer_split and dim >= 2 * align:
        target = min(target, max((dim // 2) // align * align, align))
    if dim <= target:
        return dim, dim
    t = max((target // align) * align, align)
    for cand in range(t, align - 1, -align):
        if dim % cand == 0:
            return cand, dim
    return t, pl.cdiv(dim, t) * t          # no friendly divisor: zero-pad dim


def _pick_contract_tile(dim, target, align=128):
    """Contraction (lane-dim) tile + padded dim; tiles must be 128-aligned."""
    if dim <= target:
        return dim, dim
    t = max((target // align) * align, align)
    for cand in range(t, align - 1, -align):
        if dim % cand == 0:
            return cand, dim
    return t, pl.cdiv(dim, t) * t


# ----------------------------------------------------------------------------
# Pallas kernel 1: encoder linear scorer  (B, D) @ (D, L) -> (B, L)
# grid = (batch tiles [parallel], D tiles [arbitrary]) with f32 accumulator.
# ----------------------------------------------------------------------------
def _encoder_matmul_kernel(x_ref, w_ref, o_ref, acc_ref):
    @pl.when(pl.program_id(1) == 0)
    def _():
        acc_ref[...] = jnp.zeros_like(acc_ref)

    acc_ref[...] += jnp.dot(x_ref[...], w_ref[...],
                            preferred_element_type=jnp.float32)

    @pl.when(pl.program_id(1) == pl.num_programs(1) - 1)
    def _():
        o_ref[...] = acc_ref[...]


def encoder_logits(x, w_enc, *, tile_b_target=512, tile_d_target=1024):
    """logits = x @ w_enc with bf16 MXU operands and f32 accumulation."""
    B, D = x.shape
    L = w_enc.shape[1]
    tb, Bp = _pick_batch_tile(B, tile_b_target)
    td, Dp = _pick_contract_tile(D, tile_d_target)

    xb = x.astype(jnp.bfloat16)
    wb = w_enc.astype(jnp.bfloat16)
    if Bp != B or Dp != D:
        xb = jnp.pad(xb, ((0, Bp - B), (0, Dp - D)))
    if Dp != D:
        wb = jnp.pad(wb, ((0, Dp - D), (0, 0)))

    out = pl.pallas_call(
        _encoder_matmul_kernel,
        out_shape=jax.ShapeDtypeStruct((Bp, L), jnp.float32),
        grid=(Bp // tb, Dp // td),
        in_specs=[
            pl.BlockSpec((tb, td), lambda i, d: (i, d)),
            pl.BlockSpec((td, L), lambda i, d: (d, 0)),
        ],
        out_specs=pl.BlockSpec((tb, L), lambda i, d: (i, 0)),
        scratch_shapes=[pltpu.VMEM((tb, L), jnp.float32)],
        compiler_params=pltpu.CompilerParams(
            dimension_semantics=("parallel", "arbitrary"),
            vmem_limit_bytes=_vmem_limit_bytes()),
    )(xb, wb)
    return out[:B] if Bp != B else out


# ----------------------------------------------------------------------------
# Pallas kernel 2: fused candidate build + decoder matmul + per-sample SSE.
#   grid = (num_batch_tiles,); per step:
#     base bits    : (tb, L)  bf16   argmax bit-vector of this batch tile
#     flip indices : (tb, K)  int32  (column 0 unused; column j = bit flipped
#                                     by candidate j)
#     labels       : (tb, C)  f32
#     w_dec, b_dec : (L, C) bf16, (1, C) f32   VMEM-resident, single-buffered
#   All K candidates are written candidate-major into a (K*tb, L) VMEM scratch
#   and pushed through ONE tall MXU matmul with f32 accumulation.
#   outputs:
#     dec (optional) : (K, B, C) bf16  (log-only, candidate-major => no transpose)
#     ssq            : (B, K)    f32   per-(sample, candidate) sum-of-squares
# ----------------------------------------------------------------------------
def _marg_kernel(base_ref, flip_ref, lbl_ref, w_ref, b_ref, *refs, emit_dec):
    if emit_dec:
        dec_ref, ssq_ref, z_ref = refs
    else:
        ssq_ref, z_ref = refs
        dec_ref = None

    base = base_ref[...]                       # (tb, L) bf16, exact 0/1 bits
    fi = flip_ref[...]                         # (tb, K) i32 (column 0 unused)
    lbl = lbl_ref[...]                         # (tb, C) f32
    tb, L = base.shape
    K = ssq_ref.shape[-1]
    zdt = z_ref.dtype

    # Candidate construction in VMEM (candidate-major): rows [j*tb, (j+1)*tb)
    # hold candidate j.  Candidate 0 is the argmax bit-vector; candidate j >= 1
    # flips the j-th least-confident bit (index fi[:, j]).
    lane = jax.lax.broadcasted_iota(jnp.int32, (tb, L), 1)
    basez = base.astype(zdt)
    z_ref[0:tb, :] = basez
    for j in range(1, K):
        onehot = (lane == fi[:, j:j + 1]).astype(zdt)
        z_ref[j * tb:(j + 1) * tb, :] = jnp.abs(basez - onehot)

    # Single tall (K*tb, L) @ (L, C) MXU matmul, f32 accumulation.
    out = jnp.dot(z_ref[...].astype(jnp.bfloat16), w_ref[...],
                  preferred_element_type=jnp.float32) + b_ref[...]

    for j in range(K):
        oj = out[j * tb:(j + 1) * tb, :]                      # (tb, C) f32
        if dec_ref is not None:
            dec_ref[j, :, :] = oj.astype(dec_ref.dtype)       # bf16 log store
        d = oj - lbl
        ssq_ref[:, j:j + 1] = jnp.sum(d * d, axis=-1, keepdims=True)


def marginal_decoder_loss(base_bits, flip_idx, w_dec, b_dec, labels, *,
                          tile_b_target=256, emit_decoder_output=True,
                          single_buffer_weights=True):
    B, L = base_bits.shape
    K = flip_idx.shape[1]
    C = w_dec.shape[1]
    tb, Bp = _pick_batch_tile(B, tile_b_target)
    nb = Bp // tb

    base_p = base_bits.astype(jnp.bfloat16)
    flip_p = flip_idx.astype(jnp.int32)
    lbl_p = labels.astype(jnp.float32)
    if Bp != B:
        pad = ((0, Bp - B), (0, 0))
        base_p, flip_p, lbl_p = (jnp.pad(a, pad) for a in (base_p, flip_p, lbl_p))

    def _resident(shape):
        # Weights never change across the grid; single-buffer them to halve
        # their VMEM reservation (Pallas double-buffers every input by default).
        if single_buffer_weights:
            return pl.BlockSpec(shape, lambda i: (0, 0),
                                pipeline_mode=pl.Buffered(1))
        return pl.BlockSpec(shape, lambda i: (0, 0))

    # bf16 z scratch only when the candidate slabs stay 16-row (packing) aligned.
    z_dtype = jnp.bfloat16 if tb % 16 == 0 else jnp.float32

    out_shape, out_specs = [], []
    if emit_decoder_output:
        out_shape.append(jax.ShapeDtypeStruct((K, Bp, C), jnp.bfloat16))
        out_specs.append(pl.BlockSpec((K, tb, C), lambda i: (0, i, 0)))
    out_shape.append(jax.ShapeDtypeStruct((Bp, K), jnp.float32))
    out_specs.append(pl.BlockSpec((tb, K), lambda i: (i, 0)))

    res = pl.pallas_call(
        functools.partial(_marg_kernel, emit_dec=emit_decoder_output),
        out_shape=tuple(out_shape),
        grid=(nb,),
        in_specs=[
            pl.BlockSpec((tb, L), lambda i: (i, 0)),   # base bits  (bf16)
            pl.BlockSpec((tb, K), lambda i: (i, 0)),   # flip index (i32)
            pl.BlockSpec((tb, C), lambda i: (i, 0)),   # labels     (f32)
            _resident((L, C)),                         # w_dec      (bf16, resident)
            _resident((1, C)),                         # b_dec      (f32,  resident)
        ],
        out_specs=tuple(out_specs),
        scratch_shapes=[pltpu.VMEM((K * tb, L), z_dtype)],
        compiler_params=pltpu.CompilerParams(
            dimension_semantics=("parallel",),
            vmem_limit_bytes=_vmem_limit_bytes()),
    )(base_p, flip_p, lbl_p,
      w_dec.astype(jnp.bfloat16), b_dec.astype(jnp.float32).reshape(1, C))

    if emit_decoder_output:
        dec_kbc, ssq_bk = res
        if Bp != B:
            dec_kbc, ssq_bk = dec_kbc[:, :B], ssq_bk[:B]
        return dec_kbc, ssq_bk
    (ssq_bk,) = res
    if Bp != B:
        ssq_bk = ssq_bk[:B]
    return None, ssq_bk


# ----------------------------------------------------------------------------
# Plain-JAX glue: top-k single-bit-flip enumeration + sparsemax + entropy
# ----------------------------------------------------------------------------
def sparsemax(scores):
    """Sparsemax along the last axis (K is tiny; plain-JAX glue)."""
    K = scores.shape[-1]
    z_sorted = jnp.sort(scores, axis=-1)[..., ::-1]
    cssv = jnp.cumsum(z_sorted, axis=-1) - 1.0
    ks = jnp.arange(1, K + 1, dtype=scores.dtype)
    cond = (z_sorted - cssv / ks) > 0
    k_sel = jnp.sum(cond.astype(jnp.int32), axis=-1, keepdims=True)
    tau = jnp.take_along_axis(cssv, k_sel - 1, axis=-1) / k_sel.astype(scores.dtype)
    return jnp.maximum(scores - tau, 0.0)


def topk_sparsemax_encoder(x, w_enc, k):
    """Synthetic TopKSparsemaxWrapper.

    Returns a compact sample representation (base bits + flip indices; the
    (K, B, L) bit-vector tensor is reconstructed inside the fused decoder
    kernel rather than being materialized in HBM), sparsemax probs, entropy.
    """
    if k < 1:
        raise ValueError(f"k must be >= 1, got {k}")
    logits = encoder_logits(x, w_enc)                       # (B, L) f32, Pallas
    B, L = logits.shape
    if k - 1 > L:
        raise ValueError(f"k-1={k - 1} single-bit-flip candidates need k-1 <= L={L}")

    abs_logits = jnp.abs(logits)
    base_bits = (logits > 0).astype(jnp.bfloat16)           # exact 0/1 in bf16
    base_score = jnp.sum(jnp.maximum(logits, 0.0), axis=-1, keepdims=True)

    if k > 1:
        # k-1 least-confident bits; rank-1 identity: flipping bit i changes the
        # candidate score by exactly -|logits[i]| -> no (B, K, L) reduce built.
        neg_abs, flip_idx = jax.lax.top_k(-abs_logits, k - 1)      # (B, k-1)
        scores = jnp.concatenate([base_score, base_score + neg_abs], axis=-1)
    else:
        flip_idx = jnp.zeros((B, 0), jnp.int32)
        scores = base_score
    # Column 0 is unused padding so candidate j <-> column j in the kernel.
    flip_full = jnp.concatenate(
        [jnp.zeros((B, 1), jnp.int32), flip_idx.astype(jnp.int32)], axis=-1)

    probs = sparsemax(scores)                                # (B, k)
    safe = jnp.where(probs > 0, probs, 1.0)                  # NaN-free gradients
    entropy = -jnp.sum(probs * jnp.log(safe), axis=-1).mean()
    return base_bits, flip_full, probs, entropy


# ----------------------------------------------------------------------------
# TopKSparsemaxMarg.forward
# ----------------------------------------------------------------------------
def topk_sparsemax_marg_forward(params, encoder_input, decoder_input, labels,
                                k, encoder_entropy_coeff=0.0,
                                emit_decoder_output=True,
                                single_buffer_weights=True):
    del decoder_input  # DeterministicWrapper decoder only consumes the latent z
    w_enc, w_dec, b_dec = params

    base_bits, flip_full, encoder_probs, encoder_entropy = topk_sparsemax_encoder(
        encoder_input, w_enc, k)

    batch_size = encoder_input.shape[0]
    n_out = labels.shape[-1]
    entropy_loss = -(encoder_entropy * encoder_entropy_coeff)

    dec_kbc, ssq_bk = marginal_decoder_loss(
        base_bits, flip_full, w_dec, b_dec, labels,
        emit_decoder_output=emit_decoder_output,
        single_buffer_weights=single_buffer_weights)

    loss_components = ssq_bk * (1.0 / n_out)            # (B, K) per-sample MSE
    # Sparsemax marginalization: zero-probability candidates contribute exactly
    # 0, matching the PyTorch boolean-mask compaction without a dynamic shape.
    loss = jnp.sum(encoder_probs * loss_components) / batch_size
    full_loss = loss + entropy_loss

    logs = {
        'loss': loss,
        'encoder_entropy': encoder_entropy,
        'support': jnp.sum((encoder_probs > 0).astype(jnp.float32), axis=-1),
        'distr': encoder_probs,
        # Log-only artifacts in candidate-major (K, B) row ordering so
        # loss_output[r] pairs with decoder_output[r] without transposing the
        # large (K, B, C) tensor; decoder_output is stored bf16.
        'loss_output': loss_components.T.reshape(-1),
        'decoder_output': (dec_kbc.reshape(k * batch_size, n_out)
                           if emit_decoder_output else None),
    }
    return {'loss': full_loss, 'log': logs}


# ----------------------------------------------------------------------------
if __name__ == "__main__":
    B, D_ENC, D_DEC, L, C, K = 8, 32, 32, 16, 16, 4

    key = jax.random.PRNGKey(0)
    k_x, k_dec_in, k_lbl, k_wenc, k_wdec, k_bdec = jax.random.split(key, 6)

    encoder_input = jax.random.normal(k_x, (B, D_ENC), jnp.float32)
    decoder_input = jax.random.normal(k_dec_in, (B, D_DEC), jnp.float32)
    labels = jax.random.normal(k_lbl, (B, C), jnp.float32)

    w_enc = jax.random.normal(k_wenc, (D_ENC, L), jnp.float32) * 0.1
    w_dec = jax.random.normal(k_wdec, (L, C), jnp.float32) * 0.1
    b_dec = jax.random.normal(k_bdec, (1, C), jnp.float32) * 0.1
    params = (w_enc, w_dec, b_dec)

    def run(single_buffer_weights):
        fwd = jax.jit(functools.partial(
            topk_sparsemax_marg_forward, k=K, encoder_entropy_coeff=0.0,
            single_buffer_weights=single_buffer_weights))
        out = fwd(params, encoder_input, decoder_input, labels)
        jax.block_until_ready(out)
        return out

    try:
        out = run(single_buffer_weights=True)
    except Exception:
        # Fallback for JAX versions without BlockSpec(pipeline_mode=pl.Buffered).
        out = run(single_buffer_weights=False)

    # Pure-JAX reference (same bf16 casts as the kernels) for a sanity check.
    def reference(params, x, lbls, k):
        w_enc, w_dec, b_dec = params
        logits = jnp.dot(x.astype(jnp.bfloat16), w_enc.astype(jnp.bfloat16),
                         preferred_element_type=jnp.float32)
        base = (logits > 0).astype(jnp.float32)
        _, idx = jax.lax.top_k(-jnp.abs(logits), k - 1)
        onehots = jax.nn.one_hot(idx, logits.shape[1], dtype=jnp.float32)
        z = jnp.concatenate(
            [base[:, None, :], jnp.abs(base[:, None, :] - onehots)], axis=1)
        probs = sparsemax(jnp.einsum('bkl,bl->bk', z, logits))
        dec = jnp.einsum('bkl,lc->bkc', z,
                         w_dec.astype(jnp.bfloat16).astype(jnp.float32)) + b_dec
        mse = jnp.mean((dec - lbls[:, None, :]) ** 2, axis=-1)       # (B, k)
        loss = jnp.sum(probs * mse) / x.shape[0]
        return loss, probs

    ref_loss, ref_probs = reference(params, encoder_input, labels, K)

    assert out['loss'].shape == ()
    assert out['log']['distr'].shape == (B, K)
    assert out['log']['loss_output'].shape == (B * K,)
    assert out['log']['decoder_output'].shape == (B * K, C)
    assert bool(jnp.isfinite(out['loss']))
    assert bool(jnp.allclose(out['loss'], ref_loss, rtol=5e-2, atol=5e-2)), \
        (out['loss'], ref_loss)
    assert bool(jnp.allclose(out['log']['distr'], ref_probs, rtol=5e-2, atol=5e-2))
    print("KERNEL_OK")
</pallas_src>

<mosaic_0001>
module attributes {stable_mosaic.version = 11 : i64} {
  func.func @_encoder_matmul_kernel(%arg0: i32, %arg1: i32, %arg2: memref<8x32xbf16, #tpu.memory_space<vmem>>, %arg3: memref<32x16xbf16, #tpu.memory_space<vmem>>, %arg4: memref<8x16xf32, #tpu.memory_space<vmem>>, %arg5: memref<8x16xf32, #tpu.memory_space<vmem>>) attributes {dimension_semantics = [#tpu.dimension_semantics<parallel>, #tpu.dimension_semantics<arbitrary>], iteration_bounds = array<i64: 1, 1>, scalar_prefetch = 0 : i64, scratch_operands = 1 : i64, tpu.core_type = #tpu.core_type<tc>, window_params = [{transform_indices = @transform_0, window_bounds = array<i64: 8, 32>}, {transform_indices = @transform_1, window_bounds = array<i64: 32, 16>}, {transform_indices = @transform_2, window_bounds = array<i64: 8, 16>}]} {
    %c0_i32 = arith.constant 0 : i32
    %0 = arith.cmpi eq, %arg1, %c0_i32 : i32
    %1 = arith.extui %0 : i1 to i32
    %c0_i32_0 = arith.constant 0 : i32
    %2 = arith.cmpi ne, %1, %c0_i32_0 : i32
    scf.if %2 {
      %cst_10 = arith.constant 0.000000e+00 : f32
      %12 = vector.broadcast %cst_10 : f32 to vector<8x16xf32>
      %c0_11 = arith.constant 0 : index
      %c0_12 = arith.constant 0 : index
      %13 = vector.load %arg5[%c0_11, %c0_12] : memref<8x16xf32, #tpu.memory_space<vmem>>, vector<8x16xf32>
      tpu.vector_store %arg5[%c0_11, %c0_12], %12 {strides = array<i32>} : memref<8x16xf32, #tpu.memory_space<vmem>>, vector<8x16xf32>,
    } else {
    }
    %c0 = arith.constant 0 : index
    %c0_1 = arith.constant 0 : index
    %3 = vector.load %arg5[%c0, %c0_1] : memref<8x16xf32, #tpu.memory_space<vmem>>, vector<8x16xf32>
    %c0_2 = arith.constant 0 : index
    %c0_3 = arith.constant 0 : index
    %4 = vector.load %arg2[%c0_2, %c0_3] : memref<8x32xbf16, #tpu.memory_space<vmem>>, vector<8x32xbf16>
    %c0_4 = arith.constant 0 : index
    %c0_5 = arith.constant 0 : index
    %5 = vector.load %arg3[%c0_4, %c0_5] : memref<32x16xbf16, #tpu.memory_space<vmem>>, vector<32x16xbf16>
    %cst = arith.constant dense<0.000000e+00> : vector<8x16xf32>
    %6 = tpu.matmul %4, %5, %cst {dimension_numbers = #tpu.dot_dimension_numbers<[1], [0], [0], [1], [0, 0, 1, 1], [], []>} : vector<8x32xbf16>, vector<32x16xbf16>, vector<8x16xf32> -> vector<8x16xf32>
    %7 = arith.addf %3, %6 : vector<8x16xf32>
    %c0_6 = arith.constant 0 : index
    %c0_7 = arith.constant 0 : index
    %8 = vector.load %arg5[%c0_6, %c0_7] : memref<8x16xf32, #tpu.memory_space<vmem>>, vector<8x16xf32>
    tpu.vector_store %arg5[%c0_6, %c0_7], %7 {strides = array<i32>} : memref<8x16xf32, #tpu.memory_space<vmem>>, vector<8x16xf32>,
    %c0_i32_8 = arith.constant 0 : i32
    %9 = arith.cmpi eq, %arg1, %c0_i32_8 : i32
    %10 = arith.extui %9 : i1 to i32
    %c0_i32_9 = arith.constant 0 : i32
    %11 = arith.cmpi ne, %10, %c0_i32_9 : i32
    scf.if %11 {
      %c0_10 = arith.constant 0 : index
      %c0_11 = arith.constant 0 : index
      %12 = vector.load %arg5[%c0_10, %c0_11] : memref<8x16xf32, #tpu.memory_space<vmem>>, vector<8x16xf32>
      %c0_12 = arith.constant 0 : index
      %c0_13 = arith.constant 0 : index
      %13 = vector.load %arg4[%c0_12, %c0_13] : memref<8x16xf32, #tpu.memory_space<vmem>>, vector<8x16xf32>
      tpu.vector_store %arg4[%c0_12, %c0_13], %12 {strides = array<i32>} : memref<8x16xf32, #tpu.memory_space<vmem>>, vector<8x16xf32>,
    } else {
    }
    return
  }
  func.func @transform_0(%arg0: i32, %arg1: i32) -> (i32, i32) {
    %c0_i32 = arith.constant 0 : i32
    return %arg0, %arg1 : i32, i32
  }
  func.func @transform_1(%arg0: i32, %arg1: i32) -> (i32, i32) {
    %c0_i32 = arith.constant 0 : i32
    %c0_i32_0 = arith.constant 0 : i32
    return %arg1, %c0_i32 : i32, i32
  }
  func.func @transform_2(%arg0: i32, %arg1: i32) -> (i32, i32) {
    %c0_i32 = arith.constant 0 : i32
    %c0_i32_0 = arith.constant 0 : i32
    return %arg0, %c0_i32 : i32, i32
  }
}

module attributes {stable_mosaic.version = 11 : i64} {
  func.func @_marg_kernel(%arg0: i32, %arg1: memref<8x16xbf16, #tpu.memory_space<vmem>>, %arg2: memref<8x4xi32, #tpu.memory_space<vmem>>, %arg3: memref<8x16xf32, #tpu.memory_space<vmem>>, %arg4: memref<16x16xbf16, #tpu.memory_space<vmem>>, %arg5: memref<1x16xf32, #tpu.memory_space<vmem>>, %arg6: memref<4x8x16xbf16, #tpu.memory_space<vmem>>, %arg7: memref<8x4xf32, #tpu.memory_space<vmem>>, %arg8: memref<32x16xf32, #tpu.memory_space<vmem>>) attributes {dimension_semantics = [#tpu.dimension_semantics<parallel>], iteration_bounds = array<i64: 1>, scalar_prefetch = 0 : i64, scratch_operands = 1 : i64, tpu.core_type = #tpu.core_type<tc>, window_params = [{transform_indices = @transform_0, window_bounds = array<i64: 8, 16>}, {transform_indices = @transform_1, window_bounds = array<i64: 8, 4>}, {transform_indices = @transform_2, window_bounds = array<i64: 8, 16>}, {pipeline_mode = #tpu.pipeline_mode<synchronous>, transform_indices = @transform_3, window_bounds = array<i64: 16, 16>}, {pipeline_mode = #tpu.pipeline_mode<synchronous>, transform_indices = @transform_4, window_bounds = array<i64: 1, 16>}, {transform_indices = @transform_5, window_bounds = array<i64: 4, 8, 16>}, {transform_indices = @transform_6, window_bounds = array<i64: 8, 4>}]} {
    %c0 = arith.constant 0 : index
    %c0_0 = arith.constant 0 : index
    %0 = vector.load %arg1[%c0, %c0_0] : memref<8x16xbf16, #tpu.memory_space<vmem>>, vector<8x16xbf16>
    %c0_1 = arith.constant 0 : index
    %c0_2 = arith.constant 0 : index
    %1 = vector.load %arg2[%c0_1, %c0_2] : memref<8x4xi32, #tpu.memory_space<vmem>>, vector<8x4xi32>
    %c0_3 = arith.constant 0 : index
    %c0_4 = arith.constant 0 : index
    %2 = vector.load %arg3[%c0_3, %c0_4] : memref<8x16xf32, #tpu.memory_space<vmem>>, vector<8x16xf32>
    %3 = tpu.iota {dimensions = array<i32: 1>} : vector<8x16xi32>
    %4 = arith.extf %0 : vector<8x16xbf16> to vector<8x16xf32>
    %c0_5 = arith.constant 0 : index
    %c0_6 = arith.constant 0 : index
    %5 = vector.load %arg8[%c0_5, %c0_6] : memref<32x16xf32, #tpu.memory_space<vmem>>, vector<8x16xf32>
    tpu.vector_store %arg8[%c0_5, %c0_6], %4 {strides = array<i32>} : memref<32x16xf32, #tpu.memory_space<vmem>>, vector<8x16xf32>,
    %6 = vector.extract_strided_slice %1 {offsets = [0, 1], sizes = [8, 1], strides = [1, 1]} : vector<8x4xi32> to vector<8x1xi32>
    %7 = vector.broadcast %6 : vector<8x1xi32> to vector<8x16xi32>
    %8 = arith.cmpi eq, %3, %7 : vector<8x16xi32>
    %9 = arith.extui %8 : vector<8x16xi1> to vector<8x16xi32>
    %10 = arith.sitofp %9 : vector<8x16xi32> to vector<8x16xf32>
    %11 = arith.subf %4, %10 : vector<8x16xf32>
    %12 = math.absf %11 : vector<8x16xf32>
    %c8 = arith.constant 8 : index
    %c0_7 = arith.constant 0 : index
    %13 = vector.load %arg8[%c8, %c0_7] : memref<32x16xf32, #tpu.memory_space<vmem>>, vector<8x16xf32>
    tpu.vector_store %arg8[%c8, %c0_7], %12 {strides = array<i32>} : memref<32x16xf32, #tpu.memory_space<vmem>>, vector<8x16xf32>,
    %14 = vector.extract_strided_slice %1 {offsets = [0, 2], sizes = [8, 1], strides = [1, 1]} : vector<8x4xi32> to vector<8x1xi32>
    %15 = vector.broadcast %14 : vector<8x1xi32> to vector<8x16xi32>
    %16 = arith.cmpi eq, %3, %15 : vector<8x16xi32>
    %17 = arith.extui %16 : vector<8x16xi1> to vector<8x16xi32>
    %18 = arith.sitofp %17 : vector<8x16xi32> to vector<8x16xf32>
    %19 = arith.subf %4, %18 : vector<8x16xf32>
    %20 = math.absf %19 : vector<8x16xf32>
    %c16 = arith.constant 16 : index
    %c0_8 = arith.constant 0 : index
    %21 = vector.load %arg8[%c16, %c0_8] : memref<32x16xf32, #tpu.memory_space<vmem>>, vector<8x16xf32>
    tpu.vector_store %arg8[%c16, %c0_8], %20 {strides = array<i32>} : memref<32x16xf32, #tpu.memory_space<vmem>>, vector<8x16xf32>,
    %22 = vector.extract_strided_slice %1 {offsets = [0, 3], sizes = [8, 1], strides = [1, 1]} : vector<8x4xi32> to vector<8x1xi32>
    %23 = vector.broadcast %22 : vector<8x1xi32> to vector<8x16xi32>
    %24 = arith.cmpi eq, %3, %23 : vector<8x16xi32>
    %25 = arith.extui %24 : vector<8x16xi1> to vector<8x16xi32>
    %26 = arith.sitofp %25 : vector<8x16xi32> to vector<8x16xf32>
    %27 = arith.subf %4, %26 : vector<8x16xf32>
    %28 = math.absf %27 : vector<8x16xf32>
    %c24 = arith.constant 24 : index
    %c0_9 = arith.constant 0 : index
    %29 = vector.load %arg8[%c24, %c0_9] : memref<32x16xf32, #tpu.memory_space<vmem>>, vector<8x16xf32>
    tpu.vector_store %arg8[%c24, %c0_9], %28 {strides = array<i32>} : memref<32x16xf32, #tpu.memory_space<vmem>>, vector<8x16xf32>,
    %c0_10 = arith.constant 0 : index
    %c0_11 = arith.constant 0 : index
    %30 = vector.load %arg8[%c0_10, %c0_11] : memref<32x16xf32, #tpu.memory_space<vmem>>, vector<32x16xf32>
    %31 = arith.truncf %30 : vector<32x16xf32> to vector<32x16xbf16>
    %c0_12 = arith.constant 0 : index
    %c0_13 = arith.constant 0 : index
    %32 = vector.load %arg4[%c0_12, %c0_13] : memref<16x16xbf16, #tpu.memory_space<vmem>>, vector<16x16xbf16>
    %cst = arith.constant dense<0.000000e+00> : vector<32x16xf32>
    %33 = tpu.matmul %31, %32, %cst {dimension_numbers = #tpu.dot_dimension_numbers<[1], [0], [0], [1], [0, 0, 1, 1], [], []>} : vector<32x16xbf16>, vector<16x16xbf16>, vector<32x16xf32> -> vector<32x16xf32>
    %c0_14 = arith.constant 0 : index
    %c0_15 = arith.constant 0 : index
    %34 = vector.load %arg5[%c0_14, %c0_15] : memref<1x16xf32, #tpu.memory_space<vmem>>, vector<1x16xf32>
    %35 = vector.broadcast %34 : vector<1x16xf32> to vector<32x16xf32>
    %36 = arith.addf %33, %35 : vector<32x16xf32>
    %37 = vector.extract_strided_slice %36 {offsets = [0, 0], sizes = [8, 16], strides = [1, 1]} : vector<32x16xf32> to vector<8x16xf32>
    %38 = arith.truncf %37 : vector<8x16xf32> to vector<8x16xbf16>
    %c0_16 = arith.constant 0 : index
    %c0_17 = arith.constant 0 : index
    %c0_18 = arith.constant 0 : index
    %39 = vector.load %arg6[%c0_16, %c0_17, %c0_18] : memref<4x8x16xbf16, #tpu.memory_space<vmem>>, vector<1x8x16xbf16>
    %40 = vector.shape_cast %39 : vector<1x8x16xbf16> to vector<8x16xbf16>
    %41 = vector.shape_cast %38 : vector<8x16xbf16> to vector<1x8x16xbf16>
    tpu.vector_store %arg6[%c0_16, %c0_17, %c0_18], %41 {strides = array<i32>} : memref<4x8x16xbf16, #tpu.memory_space<vmem>>, vector<1x8x16xbf16>,
    %42 = arith.subf %37, %2 : vector<8x16xf32>
    %43 = arith.mulf %42, %42 : vector<8x16xf32>
    %cst_19 = arith.constant dense<0.000000e+00> : vector<8xf32>
    %44 = vector.multi_reduction <add>, %43, %cst_19 [1] : vector<8x16xf32> to vector<8xf32>
    %45 = vector.shape_cast %44 : vector<8xf32> to vector<8x1xf32>
    %c0_20 = arith.constant 0 : index
    %c0_21 = arith.constant 0 : index
    %46 = vector.load %arg7[%c0_20, %c0_21] : memref<8x4xf32, #tpu.memory_space<vmem>>, vector<8x1xf32>
    tpu.vector_store %arg7[%c0_20, %c0_21], %45 {strides = array<i32>} : memref<8x4xf32, #tpu.memory_space<vmem>>, vector<8x1xf32>,
    %47 = vector.extract_strided_slice %36 {offsets = [8, 0], sizes = [8, 16], strides = [1, 1]} : vector<32x16xf32> to vector<8x16xf32>
    %48 = arith.truncf %47 : vector<8x16xf32> to vector<8x16xbf16>
    %c1 = arith.constant 1 : index
    %c0_22 = arith.constant 0 : index
    %c0_23 = arith.constant 0 : index
    %49 = vector.load %arg6[%c1, %c0_22, %c0_23] : memref<4x8x16xbf16, #tpu.memory_space<vmem>>, vector<1x8x16xbf16>
    %50 = vector.shape_cast %49 : vector<1x8x16xbf16> to vector<8x16xbf16>
    %51 = vector.shape_cast %48 : vector<8x16xbf16> to vector<1x8x16xbf16>
    tpu.vector_store %arg6[%c1, %c0_22, %c0_23], %51 {strides = array<i32>} : memref<4x8x16xbf16, #tpu.memory_space<vmem>>, vector<1x8x16xbf16>,
    %52 = arith.subf %47, %2 : vector<8x16xf32>
    %53 = arith.mulf %52, %52 : vector<8x16xf32>
    %cst_24 = arith.constant dense<0.000000e+00> : vector<8xf32>
    %54 = vector.multi_reduction <add>, %53, %cst_24 [1] : vector<8x16xf32> to vector<8xf32>
    %55 = vector.shape_cast %54 : vector<8xf32> to vector<8x1xf32>
    %c0_25 = arith.constant 0 : index
    %c1_26 = arith.constant 1 : index
    %56 = vector.load %arg7[%c0_25, %c1_26] : memref<8x4xf32, #tpu.memory_space<vmem>>, vector<8x1xf32>
    tpu.vector_store %arg7[%c0_25, %c1_26], %55 {strides = array<i32>} : memref<8x4xf32, #tpu.memory_space<vmem>>, vector<8x1xf32>,
    %57 = vector.extract_strided_slice %36 {offsets = [16, 0], sizes = [8, 16], strides = [1, 1]} : vector<32x16xf32> to vector<8x16xf32>
    %58 = arith.truncf %57 : vector<8x16xf32> to vector<8x16xbf16>
    %c2 = arith.constant 2 : index
    %c0_27 = arith.constant 0 : index
    %c0_28 = arith.constant 0 : index
    %59 = vector.load %arg6[%c2, %c0_27, %c0_28] : memref<4x8x16xbf16, #tpu.memory_space<vmem>>, vector<1x8x16xbf16>
    %60 = vector.shape_cast %59 : vector<1x8x16xbf16> to vector<8x16xbf16>
    %61 = vector.shape_cast %58 : vector<8x16xbf16> to vector<1x8x16xbf16>
    tpu.vector_store %arg6[%c2, %c0_27, %c0_28], %61 {strides = array<i32>} : memref<4x8x16xbf16, #tpu.memory_space<vmem>>, vector<1x8x16xbf16>,
    %62 = arith.subf %57, %2 : vector<8x16xf32>
    %63 = arith.mulf %62, %62 : vector<8x16xf32>
    %cst_29 = arith.constant dense<0.000000e+00> : vector<8xf32>
    %64 = vector.multi_reduction <add>, %63, %cst_29 [1] : vector<8x16xf32> to vector<8xf32>
    %65 = vector.shape_cast %64 : vector<8xf32> to vector<8x1xf32>
    %c0_30 = arith.constant 0 : index
    %c2_31 = arith.constant 2 : index
    %66 = vector.load %arg7[%c0_30, %c2_31] : memref<8x4xf32, #tpu.memory_space<vmem>>, vector<8x1xf32>
    tpu.vector_store %arg7[%c0_30, %c2_31], %65 {strides = array<i32>} : memref<8x4xf32, #tpu.memory_space<vmem>>, vector<8x1xf32>,
    %67 = vector.extract_strided_slice %36 {offsets = [24, 0], sizes = [8, 16], strides = [1, 1]} : vector<32x16xf32> to vector<8x16xf32>
    %68 = arith.truncf %67 : vector<8x16xf32> to vector<8x16xbf16>
    %c3 = arith.constant 3 : index
    %c0_32 = arith.constant 0 : index
    %c0_33 = arith.constant 0 : index
    %69 = vector.load %arg6[%c3, %c0_32, %c0_33] : memref<4x8x16xbf16, #tpu.memory_space<vmem>>, vector<1x8x16xbf16>
    %70 = vector.shape_cast %69 : vector<1x8x16xbf16> to vector<8x16xbf16>
    %71 = vector.shape_cast %68 : vector<8x16xbf16> to vector<1x8x16xbf16>
    tpu.vector_store %arg6[%c3, %c0_32, %c0_33], %71 {strides = array<i32>} : memref<4x8x16xbf16, #tpu.memory_space<vmem>>, vector<1x8x16xbf16>,
    %72 = arith.subf %67, %2 : vector<8x16xf32>
    %73 = arith.mulf %72, %72 : vector<8x16xf32>
    %cst_34 = arith.constant dense<0.000000e+00> : vector<8xf32>
    %74 = vector.multi_reduction <add>, %73, %cst_34 [1] : vector<8x16xf32> to vector<8xf32>
    %75 = vector.shape_cast %74 : vector<8xf32> to vector<8x1xf32>
    %c0_35 = arith.constant 0 : index
    %c3_36 = arith.constant 3 : index
    %76 = vector.load %arg7[%c0_35, %c3_36] : memref<8x4xf32, #tpu.memory_space<vmem>>, vector<8x1xf32>
    tpu.vector_store %arg7[%c0_35, %c3_36], %75 {strides = array<i32>} : memref<8x4xf32, #tpu.memory_space<vmem>>, vector<8x1xf32>,
    return
  }
  func.func @transform_0(%arg0: i32) -> (i32, i32) {
    %c0_i32 = arith.constant 0 : i32
    %c0_i32_0 = arith.constant 0 : i32
    return %arg0, %c0_i32 : i32, i32
  }
  func.func @transform_1(%arg0: i32) -> (i32, i32) {
    %c0_i32 = arith.constant 0 : i32
    %c0_i32_0 = arith.constant 0 : i32
    return %arg0, %c0_i32 : i32, i32
  }
  func.func @transform_2(%arg0: i32) -> (i32, i32) {
    %c0_i32 = arith.constant 0 : i32
    %c0_i32_0 = arith.constant 0 : i32
    return %arg0, %c0_i32 : i32, i32
  }
  func.func @transform_3(%arg0: i32) -> (i32, i32) {
    %c0_i32 = arith.constant 0 : i32
    %c0_i32_0 = arith.constant 0 : i32
    %c0_i32_1 = arith.constant 0 : i32
    return %c0_i32, %c0_i32_0 : i32, i32
  }
  func.func @transform_4(%arg0: i32) -> (i32, i32) {
    %c0_i32 = arith.constant 0 : i32
    %c0_i32_0 = arith.constant 0 : i32
    %c0_i32_1 = arith.constant 0 : i32
    return %c0_i32, %c0_i32_0 : i32, i32
  }
  func.func @transform_5(%arg0: i32) -> (i32, i32, i32) {
    %c0_i32 = arith.constant 0 : i32
    %c0_i32_0 = arith.constant 0 : i32
    %c0_i32_1 = arith.constant 0 : i32
    return %c0_i32, %arg0, %c0_i32_0 : i32, i32, i32
  }
  func.func @transform_6(%arg0: i32) -> (i32, i32) {
    %c0_i32 = arith.constant 0 : i32
    %c0_i32_0 = arith.constant 0 : i32
    return %arg0, %c0_i32 : i32, i32
  }
}

module attributes {stable_mosaic.version = 11 : i64} {
  func.func @_encoder_matmul_kernel(%arg0: i32, %arg1: i32, %arg2: memref<8x32xbf16, #tpu.memory_space<vmem>>, %arg3: memref<32x16xbf16, #tpu.memory_space<vmem>>, %arg4: memref<8x16xf32, #tpu.memory_space<vmem>>, %arg5: memref<8x16xf32, #tpu.memory_space<vmem>>) attributes {dimension_semantics = [#tpu.dimension_semantics<parallel>, #tpu.dimension_semantics<arbitrary>], iteration_bounds = array<i64: 1, 1>, scalar_prefetch = 0 : i64, scratch_operands = 1 : i64, tpu.core_type = #tpu.core_type<tc>, window_params = [{transform_indices = @transform_0, window_bounds = array<i64: 8, 32>}, {transform_indices = @transform_1, window_bounds = array<i64: 32, 16>}, {transform_indices = @transform_2, window_bounds = array<i64: 8, 16>}]} {
    %c0_i32 = arith.constant 0 : i32
    %0 = arith.cmpi eq, %arg1, %c0_i32 : i32
    %1 = arith.extui %0 : i1 to i32
    %c0_i32_0 = arith.constant 0 : i32
    %2 = arith.cmpi ne, %1, %c0_i32_0 : i32
    scf.if %2 {
      %cst_10 = arith.constant 0.000000e+00 : f32
      %12 = vector.broadcast %cst_10 : f32 to vector<8x16xf32>
      %c0_11 = arith.constant 0 : index
      %c0_12 = arith.constant 0 : index
      %13 = vector.load %arg5[%c0_11, %c0_12] : memref<8x16xf32, #tpu.memory_space<vmem>>, vector<8x16xf32>
      tpu.vector_store %arg5[%c0_11, %c0_12], %12 {strides = array<i32>} : memref<8x16xf32, #tpu.memory_space<vmem>>, vector<8x16xf32>,
    } else {
    }
    %c0 = arith.constant 0 : index
    %c0_1 = arith.constant 0 : index
    %3 = vector.load %arg5[%c0, %c0_1] : memref<8x16xf32, #tpu.memory_space<vmem>>, vector<8x16xf32>
    %c0_2 = arith.constant 0 : index
    %c0_3 = arith.constant 0 : index
    %4 = vector.load %arg2[%c0_2, %c0_3] : memref<8x32xbf16, #tpu.memory_space<vmem>>, vector<8x32xbf16>
    %c0_4 = arith.constant 0 : index
    %c0_5 = arith.constant 0 : index
    %5 = vector.load %arg3[%c0_4, %c0_5] : memref<32x16xbf16, #tpu.memory_space<vmem>>, vector<32x16xbf16>
    %cst = arith.constant dense<0.000000e+00> : vector<8x16xf32>
    %6 = tpu.matmul %4, %5, %cst {dimension_numbers = #tpu.dot_dimension_numbers<[1], [0], [0], [1], [0, 0, 1, 1], [], []>} : vector<8x32xbf16>, vector<32x16xbf16>, vector<8x16xf32> -> vector<8x16xf32>
    %7 = arith.addf %3, %6 : vector<8x16xf32>
    %c0_6 = arith.constant 0 : index
    %c0_7 = arith.constant 0 : index
    %8 = vector.load %arg5[%c0_6, %c0_7] : memref<8x16xf32, #tpu.memory_space<vmem>>, vector<8x16xf32>
    tpu.vector_store %arg5[%c0_6, %c0_7], %7 {strides = array<i32>} : memref<8x16xf32, #tpu.memory_space<vmem>>, vector<8x16xf32>,
    %c0_i32_8 = arith.constant 0 : i32
    %9 = arith.cmpi eq, %arg1, %c0_i32_8 : i32
    %10 = arith.extui %9 : i1 to i32
    %c0_i32_9 = arith.constant 0 : i32
    %11 = arith.cmpi ne, %10, %c0_i32_9 : i32
    scf.if %11 {
      %c0_10 = arith.constant 0 : index
      %c0_11 = arith.constant 0 : index
      %12 = vector.load %arg5[%c0_10, %c0_11] : memref<8x16xf32, #tpu.memory_space<vmem>>, vector<8x16xf32>
      %c0_12 = arith.constant 0 : index
      %c0_13 = arith.constant 0 : index
      %13 = vector.load %arg4[%c0_12, %c0_13] : memref<8x16xf32, #tpu.memory_space<vmem>>, vector<8x16xf32>
      tpu.vector_store %arg4[%c0_12, %c0_13], %12 {strides = array<i32>} : memref<8x16xf32, #tpu.memory_space<vmem>>, vector<8x16xf32>,
    } else {
    }
    return
  }
  func.func @transform_0(%arg0: i32, %arg1: i32) -> (i32, i32) {
    %c0_i32 = arith.constant 0 : i32
    return %arg0, %arg1 : i32, i32
  }
  func.func @transform_1(%arg0: i32, %arg1: i32) -> (i32, i32) {
    %c0_i32 = arith.constant 0 : i32
    %c0_i32_0 = arith.constant 0 : i32
    return %arg1, %c0_i32 : i32, i32
  }
  func.func @transform_2(%arg0: i32, %arg1: i32) -> (i32, i32) {
    %c0_i32 = arith.constant 0 : i32
    %c0_i32_0 = arith.constant 0 : i32
    return %arg0, %c0_i32 : i32, i32
  }
}

module attributes {stable_mosaic.version = 11 : i64} {
  func.func @_marg_kernel(%arg0: i32, %arg1: memref<8x16xbf16, #tpu.memory_space<vmem>>, %arg2: memref<8x4xi32, #tpu.memory_space<vmem>>, %arg3: memref<8x16xf32, #tpu.memory_space<vmem>>, %arg4: memref<16x16xbf16, #tpu.memory_space<vmem>>, %arg5: memref<1x16xf32, #tpu.memory_space<vmem>>, %arg6: memref<4x8x16xbf16, #tpu.memory_space<vmem>>, %arg7: memref<8x4xf32, #tpu.memory_space<vmem>>, %arg8: memref<32x16xf32, #tpu.memory_space<vmem>>) attributes {dimension_semantics = [#tpu.dimension_semantics<parallel>], iteration_bounds = array<i64: 1>, scalar_prefetch = 0 : i64, scratch_operands = 1 : i64, tpu.core_type = #tpu.core_type<tc>, window_params = [{transform_indices = @transform_0, window_bounds = array<i64: 8, 16>}, {transform_indices = @transform_1, window_bounds = array<i64: 8, 4>}, {transform_indices = @transform_2, window_bounds = array<i64: 8, 16>}, {pipeline_mode = #tpu.pipeline_mode<synchronous>, transform_indices = @transform_3, window_bounds = array<i64: 16, 16>}, {pipeline_mode = #tpu.pipeline_mode<synchronous>, transform_indices = @transform_4, window_bounds = array<i64: 1, 16>}, {transform_indices = @transform_5, window_bounds = array<i64: 4, 8, 16>}, {transform_indices = @transform_6, window_bounds = array<i64: 8, 4>}]} {
    %c0 = arith.constant 0 : index
    %c0_0 = arith.constant 0 : index
    %0 = vector.load %arg1[%c0, %c0_0] : memref<8x16xbf16, #tpu.memory_space<vmem>>, vector<8x16xbf16>
    %c0_1 = arith.constant 0 : index
    %c0_2 = arith.constant 0 : index
    %1 = vector.load %arg2[%c0_1, %c0_2] : memref<8x4xi32, #tpu.memory_space<vmem>>, vector<8x4xi32>
    %c0_3 = arith.constant 0 : index
    %c0_4 = arith.constant 0 : index
    %2 = vector.load %arg3[%c0_3, %c0_4] : memref<8x16xf32, #tpu.memory_space<vmem>>, vector<8x16xf32>
    %3 = tpu.iota {dimensions = array<i32: 1>} : vector<8x16xi32>
    %4 = arith.extf %0 : vector<8x16xbf16> to vector<8x16xf32>
    %c0_5 = arith.constant 0 : index
    %c0_6 = arith.constant 0 : index
    %5 = vector.load %arg8[%c0_5, %c0_6] : memref<32x16xf32, #tpu.memory_space<vmem>>, vector<8x16xf32>
    tpu.vector_store %arg8[%c0_5, %c0_6], %4 {strides = array<i32>} : memref<32x16xf32, #tpu.memory_space<vmem>>, vector<8x16xf32>,
    %6 = vector.extract_strided_slice %1 {offsets = [0, 1], sizes = [8, 1], strides = [1, 1]} : vector<8x4xi32> to vector<8x1xi32>
    %7 = vector.broadcast %6 : vector<8x1xi32> to vector<8x16xi32>
    %8 = arith.cmpi eq, %3, %7 : vector<8x16xi32>
    %9 = arith.extui %8 : vector<8x16xi1> to vector<8x16xi32>
    %10 = arith.sitofp %9 : vector<8x16xi32> to vector<8x16xf32>
    %11 = arith.subf %4, %10 : vector<8x16xf32>
    %12 = math.absf %11 : vector<8x16xf32>
    %c8 = arith.constant 8 : index
    %c0_7 = arith.constant 0 : index
    %13 = vector.load %arg8[%c8, %c0_7] : memref<32x16xf32, #tpu.memory_space<vmem>>, vector<8x16xf32>
    tpu.vector_store %arg8[%c8, %c0_7], %12 {strides = array<i32>} : memref<32x16xf32, #tpu.memory_space<vmem>>, vector<8x16xf32>,
    %14 = vector.extract_strided_slice %1 {offsets = [0, 2], sizes = [8, 1], strides = [1, 1]} : vector<8x4xi32> to vector<8x1xi32>
    %15 = vector.broadcast %14 : vector<8x1xi32> to vector<8x16xi32>
    %16 = arith.cmpi eq, %3, %15 : vector<8x16xi32>
    %17 = arith.extui %16 : vector<8x16xi1> to vector<8x16xi32>
    %18 = arith.sitofp %17 : vector<8x16xi32> to vector<8x16xf32>
    %19 = arith.subf %4, %18 : vector<8x16xf32>
    %20 = math.absf %19 : vector<8x16xf32>
    %c16 = arith.constant 16 : index
    %c0_8 = arith.constant 0 : index
    %21 = vector.load %arg8[%c16, %c0_8] : memref<32x16xf32, #tpu.memory_space<vmem>>, vector<8x16xf32>
    tpu.vector_store %arg8[%c16, %c0_8], %20 {strides = array<i32>} : memref<32x16xf32, #tpu.memory_space<vmem>>, vector<8x16xf32>,
    %22 = vector.extract_strided_slice %1 {offsets = [0, 3], sizes = [8, 1], strides = [1, 1]} : vector<8x4xi32> to vector<8x1xi32>
    %23 = vector.broadcast %22 : vector<8x1xi32> to vector<8x16xi32>
    %24 = arith.cmpi eq, %3, %23 : vector<8x16xi32>
    %25 = arith.extui %24 : vector<8x16xi1> to vector<8x16xi32>
    %26 = arith.sitofp %25 : vector<8x16xi32> to vector<8x16xf32>
    %27 = arith.subf %4, %26 : vector<8x16xf32>
    %28 = math.absf %27 : vector<8x16xf32>
    %c24 = arith.constant 24 : index
    %c0_9 = arith.constant 0 : index
    %29 = vector.load %arg8[%c24, %c0_9] : memref<32x16xf32, #tpu.memory_space<vmem>>, vector<8x16xf32>
    tpu.vector_store %arg8[%c24, %c0_9], %28 {strides = array<i32>} : memref<32x16xf32, #tpu.memory_space<vmem>>, vector<8x16xf32>,
    %c0_10 = arith.constant 0 : index
    %c0_11 = arith.constant 0 : index
    %30 = vector.load %arg8[%c0_10, %c0_11] : memref<32x16xf32, #tpu.memory_space<vmem>>, vector<32x16xf32>
    %31 = arith.truncf %30 : vector<32x16xf32> to vector<32x16xbf16>
    %c0_12 = arith.constant 0 : index
    %c0_13 = arith.constant 0 : index
    %32 = vector.load %arg4[%c0_12, %c0_13] : memref<16x16xbf16, #tpu.memory_space<vmem>>, vector<16x16xbf16>
    %cst = arith.constant dense<0.000000e+00> : vector<32x16xf32>
    %33 = tpu.matmul %31, %32, %cst {dimension_numbers = #tpu.dot_dimension_numbers<[1], [0], [0], [1], [0, 0, 1, 1], [], []>} : vector<32x16xbf16>, vector<16x16xbf16>, vector<32x16xf32> -> vector<32x16xf32>
    %c0_14 = arith.constant 0 : index
    %c0_15 = arith.constant 0 : index
    %34 = vector.load %arg5[%c0_14, %c0_15] : memref<1x16xf32, #tpu.memory_space<vmem>>, vector<1x16xf32>
    %35 = vector.broadcast %34 : vector<1x16xf32> to vector<32x16xf32>
    %36 = arith.addf %33, %35 : vector<32x16xf32>
    %37 = vector.extract_strided_slice %36 {offsets = [0, 0], sizes = [8, 16], strides = [1, 1]} : vector<32x16xf32> to vector<8x16xf32>
    %38 = arith.truncf %37 : vector<8x16xf32> to vector<8x16xbf16>
    %c0_16 = arith.constant 0 : index
    %c0_17 = arith.constant 0 : index
    %c0_18 = arith.constant 0 : index
    %39 = vector.load %arg6[%c0_16, %c0_17, %c0_18] : memref<4x8x16xbf16, #tpu.memory_space<vmem>>, vector<1x8x16xbf16>
    %40 = vector.shape_cast %39 : vector<1x8x16xbf16> to vector<8x16xbf16>
    %41 = vector.shape_cast %38 : vector<8x16xbf16> to vector<1x8x16xbf16>
    tpu.vector_store %arg6[%c0_16, %c0_17, %c0_18], %41 {strides = array<i32>} : memref<4x8x16xbf16, #tpu.memory_space<vmem>>, vector<1x8x16xbf16>,
    %42 = arith.subf %37, %2 : vector<8x16xf32>
    %43 = arith.mulf %42, %42 : vector<8x16xf32>
    %cst_19 = arith.constant dense<0.000000e+00> : vector<8xf32>
    %44 = vector.multi_reduction <add>, %43, %cst_19 [1] : vector<8x16xf32> to vector<8xf32>
    %45 = vector.shape_cast %44 : vector<8xf32> to vector<8x1xf32>
    %c0_20 = arith.constant 0 : index
    %c0_21 = arith.constant 0 : index
    %46 = vector.load %arg7[%c0_20, %c0_21] : memref<8x4xf32, #tpu.memory_space<vmem>>, vector<8x1xf32>
    tpu.vector_store %arg7[%c0_20, %c0_21], %45 {strides = array<i32>} : memref<8x4xf32, #tpu.memory_space<vmem>>, vector<8x1xf32>,
    %47 = vector.extract_strided_slice %36 {offsets = [8, 0], sizes = [8, 16], strides = [1, 1]} : vector<32x16xf32> to vector<8x16xf32>
    %48 = arith.truncf %47 : vector<8x16xf32> to vector<8x16xbf16>
    %c1 = arith.constant 1 : index
    %c0_22 = arith.constant 0 : index
    %c0_23 = arith.constant 0 : index
    %49 = vector.load %arg6[%c1, %c0_22, %c0_23] : memref<4x8x16xbf16, #tpu.memory_space<vmem>>, vector<1x8x16xbf16>
    %50 = vector.shape_cast %49 : vector<1x8x16xbf16> to vector<8x16xbf16>
    %51 = vector.shape_cast %48 : vector<8x16xbf16> to vector<1x8x16xbf16>
    tpu.vector_store %arg6[%c1, %c0_22, %c0_23], %51 {strides = array<i32>} : memref<4x8x16xbf16, #tpu.memory_space<vmem>>, vector<1x8x16xbf16>,
    %52 = arith.subf %47, %2 : vector<8x16xf32>
    %53 = arith.mulf %52, %52 : vector<8x16xf32>
    %cst_24 = arith.constant dense<0.000000e+00> : vector<8xf32>
    %54 = vector.multi_reduction <add>, %53, %cst_24 [1] : vector<8x16xf32> to vector<8xf32>
    %55 = vector.shape_cast %54 : vector<8xf32> to vector<8x1xf32>
    %c0_25 = arith.constant 0 : index
    %c1_26 = arith.constant 1 : index
    %56 = vector.load %arg7[%c0_25, %c1_26] : memref<8x4xf32, #tpu.memory_space<vmem>>, vector<8x1xf32>
    tpu.vector_store %arg7[%c0_25, %c1_26], %55 {strides = array<i32>} : memref<8x4xf32, #tpu.memory_space<vmem>>, vector<8x1xf32>,
    %57 = vector.extract_strided_slice %36 {offsets = [16, 0], sizes = [8, 16], strides = [1, 1]} : vector<32x16xf32> to vector<8x16xf32>
    %58 = arith.truncf %57 : vector<8x16xf32> to vector<8x16xbf16>
    %c2 = arith.constant 2 : index
    %c0_27 = arith.constant 0 : index
    %c0_28 = arith.constant 0 : index
    %59 = vector.load %arg6[%c2, %c0_27, %c0_28] : memref<4x8x16xbf16, #tpu.memory_space<vmem>>, vector<1x8x16xbf16>
    %60 = vector.shape_cast %59 : vector<1x8x16xbf16> to vector<8x16xbf16>
    %61 = vector.shape_cast %58 : vector<8x16xbf16> to vector<1x8x16xbf16>
    tpu.vector_store %arg6[%c2, %c0_27, %c0_28], %61 {strides = array<i32>} : memref<4x8x16xbf16, #tpu.memory_space<vmem>>, vector<1x8x16xbf16>,
    %62 = arith.subf %57, %2 : vector<8x16xf32>
    %63 = arith.mulf %62, %62 : vector<8x16xf32>
    %cst_29 = arith.constant dense<0.000000e+00> : vector<8xf32>
    %64 = vector.multi_reduction <add>, %63, %cst_29 [1] : vector<8x16xf32> to vector<8xf32>
    %65 = vector.shape_cast %64 : vector<8xf32> to vector<8x1xf32>
    %c0_30 = arith.constant 0 : index
    %c2_31 = arith.constant 2 : index
    %66 = vector.load %arg7[%c0_30, %c2_31] : memref<8x4xf32, #tpu.memory_space<vmem>>, vector<8x1xf32>
    tpu.vector_store %arg7[%c0_30, %c2_31], %65 {strides = array<i32>} : memref<8x4xf32, #tpu.memory_space<vmem>>, vector<8x1xf32>,
    %67 = vector.extract_strided_slice %36 {offsets = [24, 0], sizes = [8, 16], strides = [1, 1]} : vector<32x16xf32> to vector<8x16xf32>
    %68 = arith.truncf %67 : vector<8x16xf32> to vector<8x16xbf16>
    %c3 = arith.constant 3 : index
    %c0_32 = arith.constant 0 : index
    %c0_33 = arith.constant 0 : index
    %69 = vector.load %arg6[%c3, %c0_32, %c0_33] : memref<4x8x16xbf16, #tpu.memory_space<vmem>>, vector<1x8x16xbf16>
    %70 = vector.shape_cast %69 : vector<1x8x16xbf16> to vector<8x16xbf16>
    %71 = vector.shape_cast %68 : vector<8x16xbf16> to vector<1x8x16xbf16>
    tpu.vector_store %arg6[%c3, %c0_32, %c0_33], %71 {strides = array<i32>} : memref<4x8x16xbf16, #tpu.memory_space<vmem>>, vector<1x8x16xbf16>,
    %72 = arith.subf %67, %2 : vector<8x16xf32>
    %73 = arith.mulf %72, %72 : vector<8x16xf32>
    %cst_34 = arith.constant dense<0.000000e+00> : vector<8xf32>
    %74 = vector.multi_reduction <add>, %73, %cst_34 [1] : vector<8x16xf32> to vector<8xf32>
    %75 = vector.shape_cast %74 : vector<8xf32> to vector<8x1xf32>
    %c0_35 = arith.constant 0 : index
    %c3_36 = arith.constant 3 : index
    %76 = vector.load %arg7[%c0_35, %c3_36] : memref<8x4xf32, #tpu.memory_space<vmem>>, vector<8x1xf32>
    tpu.vector_store %arg7[%c0_35, %c3_36], %75 {strides = array<i32>} : memref<8x4xf32, #tpu.memory_space<vmem>>, vector<8x1xf32>,
    return
  }
  func.func @transform_0(%arg0: i32) -> (i32, i32) {
    %c0_i32 = arith.constant 0 : i32
    %c0_i32_0 = arith.constant 0 : i32
    return %arg0, %c0_i32 : i32, i32
  }
  func.func @transform_1(%arg0: i32) -> (i32, i32) {
    %c0_i32 = arith.constant 0 : i32
    %c0_i32_0 = arith.constant 0 : i32
    return %arg0, %c0_i32 : i32, i32
  }
  func.func @transform_2(%arg0: i32) -> (i32, i32) {
    %c0_i32 = arith.constant 0 : i32
    %c0_i32_0 = arith.constant 0 : i32
    return %arg0, %c0_i32 : i32, i32
  }
  func.func @transform_3(%arg0: i32) -> (i32, i32) {
    %c0_i32 = arith.constant 0 : i32
    %c0_i32_0 = arith.constant 0 : i32
    %c0_i32_1 = arith.constant 0 : i32
    return %c0_i32, %c0_i32_0 : i32, i32
  }
  func.func @transform_4(%arg0: i32) -> (i32, i32) {
    %c0_i32 = arith.constant 0 : i32
    %c0_i32_0 = arith.constant 0 : i32
    %c0_i32_1 = arith.constant 0 : i32
    return %c0_i32, %c0_i32_0 : i32, i32
  }
  func.func @transform_5(%arg0: i32) -> (i32, i32, i32) {
    %c0_i32 = arith.constant 0 : i32
    %c0_i32_0 = arith.constant 0 : i32
    %c0_i32_1 = arith.constant 0 : i32
    return %c0_i32, %arg0, %c0_i32_0 : i32, i32, i32
  }
  func.func @transform_6(%arg0: i32) -> (i32, i32) {
    %c0_i32 = arith.constant 0 : i32
    %c0_i32_0 = arith.constant 0 : i32
    return %arg0, %c0_i32 : i32, i32
  }
}

</mosaic_0001>

<llo_original>
// kernel: topk_sparsemax_marg_forward.2
$region0: #{topk_sparsemax_marg_forward.2}
  #allocation0 [shape = 'u32[]', space=smem, size = 0x4, offset = 0x4, fixed_abs, tag = 'smem constant byte address 0x4 - core index']
  #allocation1 [shape = 'u32[144,128]{1,0:T(1,128)}', space=vmem, size = 0x12000, scoped, tag = 'internal scratch']
  #allocation2 [shape = 'f32[8,16]{1,0:T(8,128)}', space=vmem, size = 0x1000, scoped, tag = 'scratch operand']
  %s0 = inlined_call_operand.vmem [shape: bf16[8,32], index: 0, kind: input, shape index: {}]
  %s1 = inlined_call_operand.vmem [shape: bf16[32,16], index: 1, kind: input, shape index: {}]
  %s2 = inlined_call_operand.vmem [shape: f32[8,16], index: 2, kind: output, shape index: {}]
  %s3 = sld [smem:[#allocation0]]
  $region26: #{topk_sparsemax_marg_forward.2} parent=0
    _
  %s5 = ssub.s32 1, %s3
  %s6 = scalar_select 0, %s5, %s3
  // Predicated region
  $region2: #{topk_sparsemax_marg_forward.2} parent=0 // pred_check
    _
  $region3: #{topk_sparsemax_marg_forward.2} parent=0 // pred_check_branch
    %8 = sbr.rel (0) target = $region5
  $region4: #{topk_sparsemax_marg_forward.2} parent=0 // pred_region
    _
  $region5: #{topk_sparsemax_marg_forward.2} parent=0 // pred_fallthru
    _
  // Predicated region
  $region6: #{topk_sparsemax_marg_forward.2} parent=0 // pred_check
    _
  $region7: #{topk_sparsemax_marg_forward.2} parent=0 // pred_check_branch
    %10 = sbr.rel (0) target = $region9
  $region8: #{topk_sparsemax_marg_forward.2} parent=0 // pred_region
    _
  $region9: #{topk_sparsemax_marg_forward.2} parent=0 // pred_fallthru
    _
  %p12 = scmp.eq.s32.totalorder 0, 0
  // Predicated region
  $region10: #{topk_sparsemax_marg_forward.2} parent=0 // pred_check
    %p13 = pneg %p12
  $region11: #{topk_sparsemax_marg_forward.2} parent=0 // pred_check_branch
    %15 = sbr.rel (%p13) target = $region13
  $region12: #{topk_sparsemax_marg_forward.2} parent=0 // pred_region
    %vm16 = vcmask 130048
    %17 = vst.msk [vmem:[#allocation2] sm:$0xff] %vm16, 0.0
  $region13: #{topk_sparsemax_marg_forward.2} parent=0 // pred_fallthru
    _
  %v18 = vld [vmem:[#allocation2] sm:$0xff]
  %v19 = vld [vmem:[%s0] sm:$0xf]
  %v20 = vld [vmem:[%s1] sm:$0xf]
  %v21 = vld [vmem:[%s1 + $0x4] sm:$0xf]
  %v22 = vld [vmem:[%s1 + $0x8] sm:$0xf]
  %v23 = vld [vmem:[%s1 + $0xc] sm:$0xf]
  %v28 = vunpack.c.l.b16 %v20
  %v29 = vunpack.c.l.b16 %v21
  %v30 = vunpack.c.l.b16 %v22
  %v31 = vunpack.c.l.b16 %v23
  %v32 = vpack.c.b16 %v29, %v28
  %v33 = vpack.c.b16 %v31, %v30
  %vm36 = vcmask 261120
  %v38 = vsel %vm36, %v19, 0
  %40 = vmatprep.subr.bf16.mxu0 0
  %41 = vmatpush1.bf16.msra.mxu0 0
  %42 = vmatprep.subr.bf16.mxu0 0
  %43 = vmatpush1.bf16.msra.mxu0 0
  %44 = vmatprep.subr.bf16.mxu0 0
  %45 = vmatpush1.bf16.msra.mxu0 0
  %46 = vmatprep.subr.bf16.mxu0 0
  %47 = vmatpush1.bf16.msra.mxu0 0
  %48 = vmatprep.subr.bf16.mxu0 0
  %49 = vmatpush1.bf16.msra.mxu0 0
  %50 = vmatprep.subr.bf16.mxu0 0
  %51 = vmatpush1.bf16.msra.mxu0 0
  %52 = vmatprep.subr.bf16.mxu0 0
  %53 = vmatpush1.bf16.msra.mxu0 %v33
  %54 = vmatprep.subr.bf16.mxu0 0
  %55 = vmatpush1.bf16.msra.mxu0 %v32
  %56 = vmatprep.subr.bf16.mxu0 0
  %57 = vmatpush2.bf16.msra.mxu0 0
  %58 = vmatprep.subr.bf16.mxu0 0
  %59 = vmatpush2.bf16.msra.mxu0 0
  %60 = vmatprep.subr.bf16.mxu0 0
  %61 = vmatpush2.bf16.msra.mxu0 0
  %62 = vmatprep.subr.bf16.mxu0 0
  %63 = vmatpush2.bf16.msra.mxu0 0
  %64 = vmatprep.subr.bf16.mxu0 0
  %65 = vmatpush2.bf16.msra.mxu0 0
  %66 = vmatprep.subr.bf16.mxu0 0
  %67 = vmatpush2.bf16.msra.mxu0 0
  %68 = vmatprep.subr.bf16.mxu0 0
  %69 = vmatpush2.bf16.msra.mxu0 0
  %70 = vmatprep.subr.bf16.mxu0 0
  %71 = vmatpush2.bf16.msra.mxu0 0
  %72 = vmatprep.mubr.bf16.mxu0 0
  %73 = vmatmul.mubr.bf16.gmra.mxu0 %v38
  %v74 = vpop.f32.mrf.mxu0
  %v75 = vadd.f32 0.0, %v74
  %v76 = vpop.f32.mrf.mxu0
  %v77 = vpop.f32.mrf.mxu0
  %v78 = vpop.f32.mrf.mxu0
  %79 = vdwg.mxu0
  %v80 = vadd.f32 %v18, %v75
  %vm81 = vcmask 130048
  %82 = vst.msk [vmem:[#allocation2] sm:$0xff] %vm81, %v80
  // Predicated region
  $region14: #{topk_sparsemax_marg_forward.2} parent=0 // pred_check
    %p83 = pneg %p12
  $region15: #{topk_sparsemax_marg_forward.2} parent=0 // pred_check_branch
    %85 = sbr.rel (%p83) target = $region17
  $region16: #{topk_sparsemax_marg_forward.2} parent=0 // pred_region
    %v86 = vld [vmem:[#allocation2] sm:$0xff]
    %87 = vst.msk [vmem:[%s2] sm:$0xff] %vm81, %v86
  $region17: #{topk_sparsemax_marg_forward.2} parent=0 // pred_fallthru
    _
  // Predicated region
  $region18: #{topk_sparsemax_marg_forward.2} parent=0 // pred_check
    _
  $region19: #{topk_sparsemax_marg_forward.2} parent=0 // pred_check_branch
    %89 = sbr.rel (0) target = $region21
  $region20: #{topk_sparsemax_marg_forward.2} parent=0 // pred_region
    _
  $region21: #{topk_sparsemax_marg_forward.2} parent=0 // pred_fallthru
    _
  // Predicated region
  $region22: #{topk_sparsemax_marg_forward.2} parent=0 // pred_check
    _
  $region23: #{topk_sparsemax_marg_forward.2} parent=0 // pred_check_branch
    %91 = sbr.rel (0) target = $region25
  $region24: #{topk_sparsemax_marg_forward.2} parent=0 // pred_region
    _
  $region25: #{topk_sparsemax_marg_forward.2} parent=0 // pred_fallthru
    _

// kernel: topk_sparsemax_marg_forward.3
$region0: #{topk_sparsemax_marg_forward.3}
  #allocation0 [shape = 'u32[]', space=smem, size = 0x4, offset = 0x4, fixed_abs, tag = 'smem constant byte address 0x4 - core index']
  #allocation1 [shape = 'u32[144,128]{1,0:T(1,128)}', space=vmem, size = 0x12000, scoped, tag = 'internal scratch']
  #allocation2 [shape = 'f32[32,16]{1,0:T(8,128)}', space=vmem, size = 0x4000, scoped, tag = 'scratch operand']
  %s0 = inlined_call_operand.vmem [shape: bf16[8,16], index: 0, kind: input, shape index: {}]
  %s1 = inlined_call_operand.vmem [shape: s32[8,4], index: 1, kind: input, shape index: {}]
  %s2 = inlined_call_operand.vmem [shape: f32[8,16], index: 2, kind: input, shape index: {}]
  %s3 = inlined_call_operand.vmem [shape: bf16[16,16], index: 3, kind: input, shape index: {}]
  %s4 = inlined_call_operand.vmem [shape: f32[1,16], index: 4, kind: input, shape index: {}]
  %s5 = inlined_call_operand.vmem [shape: bf16[4,8,16], index: 5, kind: output, shape index: {0}]
  %s6 = inlined_call_operand.vmem [shape: f32[8,4], index: 6, kind: output, shape index: {1}]
  %7 = xla_tuple %s5, %s6
  %s8 = sld [smem:[#allocation0]]
  $region38: #{topk_sparsemax_marg_forward.3} parent=0
    _
  %s10 = ssub.s32 1, %s8
  %s11 = scalar_select 0, %s10, %s8
  // Predicated region
  $region2: #{topk_sparsemax_marg_forward.3} parent=0 // pred_check
    _
  $region3: #{topk_sparsemax_marg_forward.3} parent=0 // pred_check_branch
    %13 = sbr.rel (0) target = $region5
  $region4: #{topk_sparsemax_marg_forward.3} parent=0 // pred_region
    _
  $region5: #{topk_sparsemax_marg_forward.3} parent=0 // pred_fallthru
    _
  // Predicated region
  $region6: #{topk_sparsemax_marg_forward.3} parent=0 // pred_check
    _
  $region7: #{topk_sparsemax_marg_forward.3} parent=0 // pred_check_branch
    %15 = sbr.rel (0) target = $region9
  $region8: #{topk_sparsemax_marg_forward.3} parent=0 // pred_region
    _
  $region9: #{topk_sparsemax_marg_forward.3} parent=0 // pred_fallthru
    _
  // Predicated region
  $region10: #{topk_sparsemax_marg_forward.3} parent=0 // pred_check
    _
  $region11: #{topk_sparsemax_marg_forward.3} parent=0 // pred_check_branch
    %17 = sbr.rel (0) target = $region13
  $region12: #{topk_sparsemax_marg_forward.3} parent=0 // pred_region
    _
  $region13: #{topk_sparsemax_marg_forward.3} parent=0 // pred_fallthru
    _
  // Predicated region
  $region14: #{topk_sparsemax_marg_forward.3} parent=0 // pred_check
    _
  $region15: #{topk_sparsemax_marg_forward.3} parent=0 // pred_check_branch
    %19 = sbr.rel (0) target = $region17
  $region16: #{topk_sparsemax_marg_forward.3} parent=0 // pred_region
    _
  $region17: #{topk_sparsemax_marg_forward.3} parent=0 // pred_fallthru
    _
  // Predicated region
  $region18: #{topk_sparsemax_marg_forward.3} parent=0 // pred_check
    _
  $region19: #{topk_sparsemax_marg_forward.3} parent=0 // pred_check_branch
    %21 = sbr.rel (0) target = $region21
  $region20: #{topk_sparsemax_marg_forward.3} parent=0 // pred_region
    _
  $region21: #{topk_sparsemax_marg_forward.3} parent=0 // pred_fallthru
    _
  %v23 = vld [vmem:[%s0] sm:$0xf]
  %v24 = vld [vmem:[%s1] sm:$0xff]
  %v25 = vld [vmem:[%s2] sm:$0xff]
  %v26 = vlaneseq
  %v27 = vand.u32 %v26, 127
  %v28 = vunpack.c.l.bf16 %v23
  %vm29 = vcmask 130048
  %30 = vst.msk [vmem:[#allocation2] sm:$0xff] %vm29, %v28
  %31 = vset.pattern.permute.xlu0 1
  %32 = vperm.xlu0 %31, %v24
  %v33 = vpop.permute.xlu0 %32
  %vm34 = vcmp.eq.s32.totalorder %v27, %v33
  %v35 = vsel %vm34, 1, 0
  %v36 = vcvt.s32.f32 %v35
  %v37 = vsub.f32 %v28, %v36
  %v38 = vand.u32 2147483647, %v37
  %39 = vst.msk [vmem:[#allocation2 + $0x8] sm:$0xff] %vm29, %v38
  %40 = vset.pattern.permute.xlu0 2
  %41 = vperm.xlu0 %40, %v24
  %v42 = vpop.permute.xlu0 %41
  %vm43 = vcmp.eq.s32.totalorder %v27, %v42
  %v44 = vsel %vm43, 1, 0
  %v45 = vcvt.s32.f32 %v44
  %v46 = vsub.f32 %v28, %v45
  %v47 = vand.u32 2147483647, %v46
  %48 = vst.msk [vmem:[#allocation2 + $0x10] sm:$0xff] %vm29, %v47
  %49 = vset.pattern.permute.xlu0 3
  %50 = vperm.xlu0 %49, %v24
  %v51 = vpop.permute.xlu0 %50
  %vm52 = vcmp.eq.s32.totalorder %v27, %v51
  %v53 = vsel %vm52, 1, 0
  %v54 = vcvt.s32.f32 %v53
  %v55 = vsub.f32 %v28, %v54
  %v56 = vand.u32 2147483647, %v55
  %57 = vst.msk [vmem:[#allocation2 + $0x18] sm:$0xff] %vm29, %v56
  %v58 = vld [vmem:[#allocation2] sm:$0xff]
  %v59 = vld [vmem:[#allocation2 + $0x8] sm:$0xff]
  %v60 = vld [vmem:[#allocation2 + $0x10] sm:$0xff]
  %v61 = vld [vmem:[#allocation2 + $0x18] sm:$0xff]
  %v62 = vpack.c.bf16 %v59, %v58
  %v63 = vpack.c.bf16 %v61, %v60
  %v64 = vld [vmem:[%s3] sm:$0xf]
  %v65 = vld [vmem:[%s3 + $0x4] sm:$0xf]
  %v66 = vld [vmem:[%s4] sm:$0x1]
  %v68 = vlaneseq
  %v69 = vshrl.u32 %v68, 7
  %v70 = vsub.s32 0, %v69
  %v71 = vrot.slane %v66, %v70
  %v75 = vunpack.c.l.b16 %v64
  %v76 = vunpack.c.l.b16 %v65
  %v77 = vpack.c.b16 %v76, %v75
  %v80 = vsel %vm29, %v62, 0
  %v83 = vsel %vm29, %v63, 0
  %85 = vmatprep.subr.bf16.mxu0 0
  %86 = vmatpush1.bf16.msra.mxu0 0
  %87 = vmatprep.subr.bf16.mxu0 0
  %88 = vmatpush1.bf16.msra.mxu0 0
  %89 = vmatprep.subr.bf16.mxu0 0
  %90 = vmatpush1.bf16.msra.mxu0 0
  %91 = vmatprep.subr.bf16.mxu0 0
  %92 = vmatpush1.bf16.msra.mxu0 0
  %93 = vmatprep.subr.bf16.mxu0 0
  %94 = vmatpush1.bf16.msra.mxu0 0
  %95 = vmatprep.subr.bf16.mxu0 0
  %96 = vmatpush1.bf16.msra.mxu0 0
  %97 = vmatprep.subr.bf16.mxu0 0
  %98 = vmatpush1.bf16.msra.mxu0 0
  %99 = vmatprep.subr.bf16.mxu0 0
  %100 = vmatpush1.bf16.msra.mxu0 %v77
  %101 = vmatprep.subr.bf16.mxu0 0
  %102 = vmatpush2.bf16.msra.mxu0 0
  %103 = vmatprep.subr.bf16.mxu0 0
  %104 = vmatpush2.bf16.msra.mxu0 0
  %105 = vmatprep.subr.bf16.mxu0 0
  %106 = vmatpush2.bf16.msra.mxu0 0
  %107 = vmatprep.subr.bf16.mxu0 0
  %108 = vmatpush2.bf16.msra.mxu0 0
  %109 = vmatprep.subr.bf16.mxu0 0
  %110 = vmatpush2.bf16.msra.mxu0 0
  %111 = vmatprep.subr.bf16.mxu0 0
  %112 = vmatpush2.bf16.msra.mxu0 0
  %113 = vmatprep.subr.bf16.mxu0 0
  %114 = vmatpush2.bf16.msra.mxu0 0
  %115 = vmatprep.subr.bf16.mxu0 0
  %116 = vmatpush2.bf16.msra.mxu0 0
  %117 = vmatprep.mubr.bf16.mxu0 0
  %118 = vmatmul.mubr.bf16.gmra.mxu0 %v80
  %v119 = vpop.f32.mrf.mxu0
  %v120 = vadd.f32 %v71, %v119
  %v121 = vpop.f32.mrf.mxu0
  %v122 = vpop.f32.mrf.mxu0
  %v123 = vadd.f32 %v71, %v122
  %v124 = vpop.f32.mrf.mxu0
  %125 = vmatprep.mubr.bf16.mxu0 0
  %126 = vmatmul.mubr.bf16.gmra.mxu0 %v83
  %v127 = vpop.f32.mrf.mxu0
  %v128 = vadd.f32 %v71, %v127
  %v129 = vpop.f32.mrf.mxu0
  %v130 = vpop.f32.mrf.mxu0
  %v131 = vadd.f32 %v71, %v130
  %v132 = vpop.f32.mrf.mxu0
  %133 = vdwg.mxu0
  %v134 = vpack.c.bf16 %v120, %v120
  %vm135 = vcmask 125952
  %136 = vst.msk [vmem:[%s5] sm:$0xf] %vm135, %v134
  %v137 = vsub.f32 %v120, %v25
  %v138 = vmul.f32 %v137, %v137
  %v139 = vsel %vm29, %v138, 0.0
  %140 = vadd.xlane.f32.xlu0 %v139
  %v141 = vpop.xlane.xlu0 %140
  %vm142 = vcmask 7168
  %143 = vst.msk [vmem:[%s6] sm:$0xff] %vm142, %v141
  %v144 = vpack.c.bf16 %v123, %v123
  %s145 = scalar_lea.vmem %s5, 4
  %146 = vst.msk [vmem:[%s145] sm:$0xf] %vm135, %v144
  %v147 = vsub.f32 %v123, %v25
  %v148 = vmul.f32 %v147, %v147
  %v149 = vsel %vm29, %v148, 0.0
  %150 = vadd.xlane.f32.xlu0 %v149
  %v151 = vpop.xlane.xlu0 %150
  %vm152 = vcmask 15368
  %153 = vst.msk [vmem:[%s6] sm:$0xff] %vm152, %v151
  %v154 = vpack.c.bf16 %v128, %v128
  %s155 = scalar_lea.vmem %s5, 8
  %156 = vst.msk [vmem:[%s155] sm:$0xf] %vm135, %v154
  %v157 = vsub.f32 %v128, %v25
  %v158 = vmul.f32 %v157, %v157
  %v159 = vsel %vm29, %v158, 0.0
  %160 = vadd.xlane.f32.xlu0 %v159
  %v161 = vpop.xlane.xlu0 %160
  %vm162 = vcmask 23568
  %163 = vst.msk [vmem:[%s6] sm:$0xff] %vm162, %v161
  %v164 = vpack.c.bf16 %v131, %v131
  %s165 = scalar_lea.vmem %s5, 12
  %166 = vst.msk [vmem:[%s165] sm:$0xf] %vm135, %v164
  %v167 = vsub.f32 %v131, %v25
  %v168 = vmul.f32 %v167, %v167
  %v169 = vsel %vm29, %v168, 0.0
  %170 = vadd.xlane.f32.xlu0 %v169
  %v171 = vpop.xlane.xlu0 %170
  %vm172 = vcmask 31768
  %173 = vst.msk [vmem:[%s6] sm:$0xff] %vm172, %v171
  // Predicated region
  $region22: #{topk_sparsemax_marg_forward.3} parent=0 // pred_check
    _
  $region23: #{topk_sparsemax_marg_forward.3} parent=0 // pred_check_branch
    %175 = sbr.rel (0) target = $region25
  $region24: #{topk_sparsemax_marg_forward.3} parent=0 // pred_region
    _
  $region25: #{topk_sparsemax_marg_forward.3} parent=0 // pred_fallthru
    _
  // Predicated region
  $region26: #{topk_sparsemax_marg_forward.3} parent=0 // pred_check
    _
  $region27: #{topk_sparsemax_marg_forward.3} parent=0 // pred_check_branch
    %177 = sbr.rel (0) target = $region29
  $region28: #{topk_sparsemax_marg_forward.3} parent=0 // pred_region
    _
  $region29: #{topk_sparsemax_marg_forward.3} parent=0 // pred_fallthru
    _
  // Predicated region
  $region30: #{topk_sparsemax_marg_forward.3} parent=0 // pred_check
    _
  $region31: #{topk_sparsemax_marg_forward.3} parent=0 // pred_check_branch
    %179 = sbr.rel (0) target = $region33
  $region32: #{topk_sparsemax_marg_forward.3} parent=0 // pred_region
    _
  $region33: #{topk_sparsemax_marg_forward.3} parent=0 // pred_fallthru
    _
  // Predicated region
  $region34: #{topk_sparsemax_marg_forward.3} parent=0 // pred_check
    _
  $region35: #{topk_sparsemax_marg_forward.3} parent=0 // pred_check_branch
    %181 = sbr.rel (0) target = $region37
  $region36: #{topk_sparsemax_marg_forward.3} parent=0 // pred_region
    _
  $region37: #{topk_sparsemax_marg_forward.3} parent=0 // pred_fallthru
    _

// kernel: topk_sparsemax_marg_forward.2
$region0: #{topk_sparsemax_marg_forward.2}
  #allocation0 [shape = 'u32[]', space=smem, size = 0x4, offset = 0x4, fixed_abs, tag = 'smem constant byte address 0x4 - core index']
  #allocation1 [shape = 'u32[144,128]{1,0:T(1,128)}', space=vmem, size = 0x12000, scoped, tag = 'internal scratch']
  #allocation2 [shape = 'f32[8,16]{1,0:T(8,128)}', space=vmem, size = 0x1000, scoped, tag = 'scratch operand']
  %s0 = inlined_call_operand.vmem [shape: bf16[8,32], index: 0, kind: input, shape index: {}]
  %s1 = inlined_call_operand.vmem [shape: bf16[32,16], index: 1, kind: input, shape index: {}]
  %s2 = inlined_call_operand.vmem [shape: f32[8,16], index: 2, kind: output, shape index: {}]
  %s3 = sld [smem:[#allocation0]]
  $region26: #{topk_sparsemax_marg_forward.2} parent=0
    _
  %s5 = ssub.s32 1, %s3
  %s6 = scalar_select 0, %s5, %s3
  // Predicated region
  $region2: #{topk_sparsemax_marg_forward.2} parent=0 // pred_check
    _
  $region3: #{topk_sparsemax_marg_forward.2} parent=0 // pred_check_branch
    %8 = sbr.rel (0) target = $region5
  $region4: #{topk_sparsemax_marg_forward.2} parent=0 // pred_region
    _
  $region5: #{topk_sparsemax_marg_forward.2} parent=0 // pred_fallthru
    _
  // Predicated region
  $region6: #{topk_sparsemax_marg_forward.2} parent=0 // pred_check
    _
  $region7: #{topk_sparsemax_marg_forward.2} parent=0 // pred_check_branch
    %10 = sbr.rel (0) target = $region9
  $region8: #{topk_sparsemax_marg_forward.2} parent=0 // pred_region
    _
  $region9: #{topk_sparsemax_marg_forward.2} parent=0 // pred_fallthru
    _
  %p12 = scmp.eq.s32.totalorder 0, 0
  // Predicated region
  $region10: #{topk_sparsemax_marg_forward.2} parent=0 // pred_check
    %p13 = pneg %p12
  $region11: #{topk_sparsemax_marg_forward.2} parent=0 // pred_check_branch
    %15 = sbr.rel (%p13) target = $region13
  $region12: #{topk_sparsemax_marg_forward.2} parent=0 // pred_region
    %vm16 = vcmask 130048
    %17 = vst.msk [vmem:[#allocation2] sm:$0xff] %vm16, 0.0
  $region13: #{topk_sparsemax_marg_forward.2} parent=0 // pred_fallthru
    _
  %v18 = vld [vmem:[#allocation2] sm:$0xff]
  %v19 = vld [vmem:[%s0] sm:$0xf]
  %v20 = vld [vmem:[%s1] sm:$0xf]
  %v21 = vld [vmem:[%s1 + $0x4] sm:$0xf]
  %v22 = vld [vmem:[%s1 + $0x8] sm:$0xf]
  %v23 = vld [vmem:[%s1 + $0xc] sm:$0xf]
  %v28 = vunpack.c.l.b16 %v20
  %v29 = vunpack.c.l.b16 %v21
  %v30 = vunpack.c.l.b16 %v22
  %v31 = vunpack.c.l.b16 %v23
  %v32 = vpack.c.b16 %v29, %v28
  %v33 = vpack.c.b16 %v31, %v30
  %vm36 = vcmask 261120
  %v38 = vsel %vm36, %v19, 0
  %40 = vmatprep.subr.bf16.mxu0 0
  %41 = vmatpush1.bf16.msra.mxu0 0
  %42 = vmatprep.subr.bf16.mxu0 0
  %43 = vmatpush1.bf16.msra.mxu0 0
  %44 = vmatprep.subr.bf16.mxu0 0
  %45 = vmatpush1.bf16.msra.mxu0 0
  %46 = vmatprep.subr.bf16.mxu0 0
  %47 = vmatpush1.bf16.msra.mxu0 0
  %48 = vmatprep.subr.bf16.mxu0 0
  %49 = vmatpush1.bf16.msra.mxu0 0
  %50 = vmatprep.subr.bf16.mxu0 0
  %51 = vmatpush1.bf16.msra.mxu0 0
  %52 = vmatprep.subr.bf16.mxu0 0
  %53 = vmatpush1.bf16.msra.mxu0 %v33
  %54 = vmatprep.subr.bf16.mxu0 0
  %55 = vmatpush1.bf16.msra.mxu0 %v32
  %56 = vmatprep.subr.bf16.mxu0 0
  %57 = vmatpush2.bf16.msra.mxu0 0
  %58 = vmatprep.subr.bf16.mxu0 0
  %59 = vmatpush2.bf16.msra.mxu0 0
  %60 = vmatprep.subr.bf16.mxu0 0
  %61 = vmatpush2.bf16.msra.mxu0 0
  %62 = vmatprep.subr.bf16.mxu0 0
  %63 = vmatpush2.bf16.msra.mxu0 0
  %64 = vmatprep.subr.bf16.mxu0 0
  %65 = vmatpush2.bf16.msra.mxu0 0
  %66 = vmatprep.subr.bf16.mxu0 0
  %67 = vmatpush2.bf16.msra.mxu0 0
  %68 = vmatprep.subr.bf16.mxu0 0
  %69 = vmatpush2.bf16.msra.mxu0 0
  %70 = vmatprep.subr.bf16.mxu0 0
  %71 = vmatpush2.bf16.msra.mxu0 0
  %72 = vmatprep.mubr.bf16.mxu0 0
  %73 = vmatmul.mubr.bf16.gmra.mxu0 %v38
  %v74 = vpop.f32.mrf.mxu0
  %v75 = vadd.f32 0.0, %v74
  %v76 = vpop.f32.mrf.mxu0
  %v77 = vpop.f32.mrf.mxu0
  %v78 = vpop.f32.mrf.mxu0
  %79 = vdwg.mxu0
  %v80 = vadd.f32 %v18, %v75
  %vm81 = vcmask 130048
  %82 = vst.msk [vmem:[#allocation2] sm:$0xff] %vm81, %v80
  // Predicated region
  $region14: #{topk_sparsemax_marg_forward.2} parent=0 // pred_check
    %p83 = pneg %p12
  $region15: #{topk_sparsemax_marg_forward.2} parent=0 // pred_check_branch
    %85 = sbr.rel (%p83) target = $region17
  $region16: #{topk_sparsemax_marg_forward.2} parent=0 // pred_region
    %v86 = vld [vmem:[#allocation2] sm:$0xff]
    %87 = vst.msk [vmem:[%s2] sm:$0xff] %vm81, %v86
  $region17: #{topk_sparsemax_marg_forward.2} parent=0 // pred_fallthru
    _
  // Predicated region
  $region18: #{topk_sparsemax_marg_forward.2} parent=0 // pred_check
    _
  $region19: #{topk_sparsemax_marg_forward.2} parent=0 // pred_check_branch
    %89 = sbr.rel (0) target = $region21
  $region20: #{topk_sparsemax_marg_forward.2} parent=0 // pred_region
    _
  $region21: #{topk_sparsemax_marg_forward.2} parent=0 // pred_fallthru
    _
  // Predicated region
  $region22: #{topk_sparsemax_marg_forward.2} parent=0 // pred_check
    _
  $region23: #{topk_sparsemax_marg_forward.2} parent=0 // pred_check_branch
    %91 = sbr.rel (0) target = $region25
  $region24: #{topk_sparsemax_marg_forward.2} parent=0 // pred_region
    _
  $region25: #{topk_sparsemax_marg_forward.2} parent=0 // pred_fallthru
    _

// kernel: topk_sparsemax_marg_forward.3
$region0: #{topk_sparsemax_marg_forward.3}
  #allocation0 [shape = 'u32[]', space=smem, size = 0x4, offset = 0x4, fixed_abs, tag = 'smem constant byte address 0x4 - core index']
  #allocation1 [shape = 'u32[144,128]{1,0:T(1,128)}', space=vmem, size = 0x12000, scoped, tag = 'internal scratch']
  #allocation2 [shape = 'f32[32,16]{1,0:T(8,128)}', space=vmem, size = 0x4000, scoped, tag = 'scratch operand']
  %s0 = inlined_call_operand.vmem [shape: bf16[8,16], index: 0, kind: input, shape index: {}]
  %s1 = inlined_call_operand.vmem [shape: s32[8,4], index: 1, kind: input, shape index: {}]
  %s2 = inlined_call_operand.vmem [shape: f32[8,16], index: 2, kind: input, shape index: {}]
  %s3 = inlined_call_operand.vmem [shape: bf16[16,16], index: 3, kind: input, shape index: {}]
  %s4 = inlined_call_operand.vmem [shape: f32[1,16], index: 4, kind: input, shape index: {}]
  %s5 = inlined_call_operand.vmem [shape: bf16[4,8,16], index: 5, kind: output, shape index: {0}]
  %s6 = inlined_call_operand.vmem [shape: f32[8,4], index: 6, kind: output, shape index: {1}]
  %7 = xla_tuple %s5, %s6
  %s8 = sld [smem:[#allocation0]]
  $region38: #{topk_sparsemax_marg_forward.3} parent=0
    _
  %s10 = ssub.s32 1, %s8
  %s11 = scalar_select 0, %s10, %s8
  // Predicated region
  $region2: #{topk_sparsemax_marg_forward.3} parent=0 // pred_check
    _
  $region3: #{topk_sparsemax_marg_forward.3} parent=0 // pred_check_branch
    %13 = sbr.rel (0) target = $region5
  $region4: #{topk_sparsemax_marg_forward.3} parent=0 // pred_region
    _
  $region5: #{topk_sparsemax_marg_forward.3} parent=0 // pred_fallthru
    _
  // Predicated region
  $region6: #{topk_sparsemax_marg_forward.3} parent=0 // pred_check
    _
  $region7: #{topk_sparsemax_marg_forward.3} parent=0 // pred_check_branch
    %15 = sbr.rel (0) target = $region9
  $region8: #{topk_sparsemax_marg_forward.3} parent=0 // pred_region
    _
  $region9: #{topk_sparsemax_marg_forward.3} parent=0 // pred_fallthru
    _
  // Predicated region
  $region10: #{topk_sparsemax_marg_forward.3} parent=0 // pred_check
    _
  $region11: #{topk_sparsemax_marg_forward.3} parent=0 // pred_check_branch
    %17 = sbr.rel (0) target = $region13
  $region12: #{topk_sparsemax_marg_forward.3} parent=0 // pred_region
    _
  $region13: #{topk_sparsemax_marg_forward.3} parent=0 // pred_fallthru
    _
  // Predicated region
  $region14: #{topk_sparsemax_marg_forward.3} parent=0 // pred_check
    _
  $region15: #{topk_sparsemax_marg_forward.3} parent=0 // pred_check_branch
    %19 = sbr.rel (0) target = $region17
  $region16: #{topk_sparsemax_marg_forward.3} parent=0 // pred_region
    _
  $region17: #{topk_sparsemax_marg_forward.3} parent=0 // pred_fallthru
    _
  // Predicated region
  $region18: #{topk_sparsemax_marg_forward.3} parent=0 // pred_check
    _
  $region19: #{topk_sparsemax_marg_forward.3} parent=0 // pred_check_branch
    %21 = sbr.rel (0) target = $region21
  $region20: #{topk_sparsemax_marg_forward.3} parent=0 // pred_region
    _
  $region21: #{topk_sparsemax_marg_forward.3} parent=0 // pred_fallthru
    _
  %v23 = vld [vmem:[%s0] sm:$0xf]
  %v24 = vld [vmem:[%s1] sm:$0xff]
  %v25 = vld [vmem:[%s2] sm:$0xff]
  %v26 = vlaneseq
  %v27 = vand.u32 %v26, 127
  %v28 = vunpack.c.l.bf16 %v23
  %vm29 = vcmask 130048
  %30 = vst.msk [vmem:[#allocation2] sm:$0xff] %vm29, %v28
  %31 = vset.pattern.permute.xlu0 1
  %32 = vperm.xlu0 %31, %v24
  %v33 = vpop.permute.xlu0 %32
  %vm34 = vcmp.eq.s32.totalorder %v27, %v33
  %v35 = vsel %vm34, 1, 0
  %v36 = vcvt.s32.f32 %v35
  %v37 = vsub.f32 %v28, %v36
  %v38 = vand.u32 2147483647, %v37
  %39 = vst.msk [vmem:[#allocation2 + $0x8] sm:$0xff] %vm29, %v38
  %40 = vset.pattern.permute.xlu0 2
  %41 = vperm.xlu0 %40, %v24
  %v42 = vpop.permute.xlu0 %41
  %vm43 = vcmp.eq.s32.totalorder %v27, %v42
  %v44 = vsel %vm43, 1, 0
  %v45 = vcvt.s32.f32 %v44
  %v46 = vsub.f32 %v28, %v45
  %v47 = vand.u32 2147483647, %v46
  %48 = vst.msk [vmem:[#allocation2 + $0x10] sm:$0xff] %vm29, %v47
  %49 = vset.pattern.permute.xlu0 3
  %50 = vperm.xlu0 %49, %v24
  %v51 = vpop.permute.xlu0 %50
  %vm52 = vcmp.eq.s32.totalorder %v27, %v51
  %v53 = vsel %vm52, 1, 0
  %v54 = vcvt.s32.f32 %v53
  %v55 = vsub.f32 %v28, %v54
  %v56 = vand.u32 2147483647, %v55
  %57 = vst.msk [vmem:[#allocation2 + $0x18] sm:$0xff] %vm29, %v56
  %v58 = vld [vmem:[#allocation2] sm:$0xff]
  %v59 = vld [vmem:[#allocation2 + $0x8] sm:$0xff]
  %v60 = vld [vmem:[#allocation2 + $0x10] sm:$0xff]
  %v61 = vld [vmem:[#allocation2 + $0x18] sm:$0xff]
  %v62 = vpack.c.bf16 %v59, %v58
  %v63 = vpack.c.bf16 %v61, %v60
  %v64 = vld [vmem:[%s3] sm:$0xf]
  %v65 = vld [vmem:[%s3 + $0x4] sm:$0xf]
  %v66 = vld [vmem:[%s4] sm:$0x1]
  %v68 = vlaneseq
  %v69 = vshrl.u32 %v68, 7
  %v70 = vsub.s32 0, %v69
  %v71 = vrot.slane %v66, %v70
  %v75 = vunpack.c.l.b16 %v64
  %v76 = vunpack.c.l.b16 %v65
  %v77 = vpack.c.b16 %v76, %v75
  %v80 = vsel %vm29, %v62, 0
  %v83 = vsel %vm29, %v63, 0
  %85 = vmatprep.subr.bf16.mxu0 0
  %86 = vmatpush1.bf16.msra.mxu0 0
  %87 = vmatprep.subr.bf16.mxu0 0
  %88 = vmatpush1.bf16.msra.mxu0 0
  %89 = vmatprep.subr.bf16.mxu0 0
  %90 = vmatpush1.bf16.msra.mxu0 0
  %91 = vmatprep.subr.bf16.mxu0 0
  %92 = vmatpush1.bf16.msra.mxu0 0
  %93 = vmatprep.subr.bf16.mxu0 0
  %94 = vmatpush1.bf16.msra.mxu0 0
  %95 = vmatprep.subr.bf16.mxu0 0
  %96 = vmatpush1.bf16.msra.mxu0 0
  %97 = vmatprep.subr.bf16.mxu0 0
  %98 = vmatpush1.bf16.msra.mxu0 0
  %99 = vmatprep.subr.bf16.mxu0 0
  %100 = vmatpush1.bf16.msra.mxu0 %v77
  %101 = vmatprep.subr.bf16.mxu0 0
  %102 = vmatpush2.bf16.msra.mxu0 0
  %103 = vmatprep.subr.bf16.mxu0 0
  %104 = vmatpush2.bf16.msra.mxu0 0
  %105 = vmatprep.subr.bf16.mxu0 0
  %106 = vmatpush2.bf16.msra.mxu0 0
  %107 = vmatprep.subr.bf16.mxu0 0
  %108 = vmatpush2.bf16.msra.mxu0 0
  %109 = vmatprep.subr.bf16.mxu0 0
  %110 = vmatpush2.bf16.msra.mxu0 0
  %111 = vmatprep.subr.bf16.mxu0 0
  %112 = vmatpush2.bf16.msra.mxu0 0
  %113 = vmatprep.subr.bf16.mxu0 0
  %114 = vmatpush2.bf16.msra.mxu0 0
  %115 = vmatprep.subr.bf16.mxu0 0
  %116 = vmatpush2.bf16.msra.mxu0 0
  %117 = vmatprep.mubr.bf16.mxu0 0
  %118 = vmatmul.mubr.bf16.gmra.mxu0 %v80
  %v119 = vpop.f32.mrf.mxu0
  %v120 = vadd.f32 %v71, %v119
  %v121 = vpop.f32.mrf.mxu0
  %v122 = vpop.f32.mrf.mxu0
  %v123 = vadd.f32 %v71, %v122
  %v124 = vpop.f32.mrf.mxu0
  %125 = vmatprep.mubr.bf16.mxu0 0
  %126 = vmatmul.mubr.bf16.gmra.mxu0 %v83
  %v127 = vpop.f32.mrf.mxu0
  %v128 = vadd.f32 %v71, %v127
  %v129 = vpop.f32.mrf.mxu0
  %v130 = vpop.f32.mrf.mxu0
  %v131 = vadd.f32 %v71, %v130
  %v132 = vpop.f32.mrf.mxu0
  %133 = vdwg.mxu0
  %v134 = vpack.c.bf16 %v120, %v120
  %vm135 = vcmask 125952
  %136 = vst.msk [vmem:[%s5] sm:$0xf] %vm135, %v134
  %v137 = vsub.f32 %v120, %v25
  %v138 = vmul.f32 %v137, %v137
  %v139 = vsel %vm29, %v138, 0.0
  %140 = vadd.xlane.f32.xlu0 %v139
  %v141 = vpop.xlane.xlu0 %140
  %vm142 = vcmask 7168
  %143 = vst.msk [vmem:[%s6] sm:$0xff] %vm142, %v141
  %v144 = vpack.c.bf16 %v123, %v123
  %s145 = scalar_lea.vmem %s5, 4
  %146 = vst.msk [vmem:[%s145] sm:$0xf] %vm135, %v144
  %v147 = vsub.f32 %v123, %v25
  %v148 = vmul.f32 %v147, %v147
  %v149 = vsel %vm29, %v148, 0.0
  %150 = vadd.xlane.f32.xlu0 %v149
  %v151 = vpop.xlane.xlu0 %150
  %vm152 = vcmask 15368
  %153 = vst.msk [vmem:[%s6] sm:$0xff] %vm152, %v151
  %v154 = vpack.c.bf16 %v128, %v128
  %s155 = scalar_lea.vmem %s5, 8
  %156 = vst.msk [vmem:[%s155] sm:$0xf] %vm135, %v154
  %v157 = vsub.f32 %v128, %v25
  %v158 = vmul.f32 %v157, %v157
  %v159 = vsel %vm29, %v158, 0.0
  %160 = vadd.xlane.f32.xlu0 %v159
  %v161 = vpop.xlane.xlu0 %160
  %vm162 = vcmask 23568
  %163 = vst.msk [vmem:[%s6] sm:$0xff] %vm162, %v161
  %v164 = vpack.c.bf16 %v131, %v131
  %s165 = scalar_lea.vmem %s5, 12
  %166 = vst.msk [vmem:[%s165] sm:$0xf] %vm135, %v164
  %v167 = vsub.f32 %v131, %v25
  %v168 = vmul.f32 %v167, %v167
  %v169 = vsel %vm29, %v168, 0.0
  %170 = vadd.xlane.f32.xlu0 %v169
  %v171 = vpop.xlane.xlu0 %170
  %vm172 = vcmask 31768
  %173 = vst.msk [vmem:[%s6] sm:$0xff] %vm172, %v171
  // Predicated region
  $region22: #{topk_sparsemax_marg_forward.3} parent=0 // pred_check
    _
  $region23: #{topk_sparsemax_marg_forward.3} parent=0 // pred_check_branch
    %175 = sbr.rel (0) target = $region25
  $region24: #{topk_sparsemax_marg_forward.3} parent=0 // pred_region
    _
  $region25: #{topk_sparsemax_marg_forward.3} parent=0 // pred_fallthru
    _
  // Predicated region
  $region26: #{topk_sparsemax_marg_forward.3} parent=0 // pred_check
    _
  $region27: #{topk_sparsemax_marg_forward.3} parent=0 // pred_check_branch
    %177 = sbr.rel (0) target = $region29
  $region28: #{topk_sparsemax_marg_forward.3} parent=0 // pred_region
    _
  $region29: #{topk_sparsemax_marg_forward.3} parent=0 // pred_fallthru
    _
  // Predicated region
  $region30: #{topk_sparsemax_marg_forward.3} parent=0 // pred_check
    _
  $region31: #{topk_sparsemax_marg_forward.3} parent=0 // pred_check_branch
    %179 = sbr.rel (0) target = $region33
  $region32: #{topk_sparsemax_marg_forward.3} parent=0 // pred_region
    _
  $region33: #{topk_sparsemax_marg_forward.3} parent=0 // pred_fallthru
    _
  // Predicated region
  $region34: #{topk_sparsemax_marg_forward.3} parent=0 // pred_check
    _
  $region35: #{topk_sparsemax_marg_forward.3} parent=0 // pred_check_branch
    %181 = sbr.rel (0) target = $region37
  $region36: #{topk_sparsemax_marg_forward.3} parent=0 // pred_region
    _
  $region37: #{topk_sparsemax_marg_forward.3} parent=0 // pred_fallthru
    _

</llo_original>
